<compile_context>
chip_gen: v7x
topology: tpu7x:2x2x1
jax: 0.10.0
libtpu: 0.0.40
codegen_flags: <defaults>
</compile_context>

<pallas_src>
import functools

import jax
import jax.numpy as jnp
from jax.experimental import pallas as pl
from jax.experimental.pallas import tpu as pltpu

LN_EPS = 1e-5  # PyTorch nn.LayerNorm default


def _layernorm_fused(x, gamma, beta):
    """LayerNorm over last axis, biased variance, single pass over x.

    Uses var = E[x^2] - mean^2 so both reductions are issued back-to-back on
    the XLU instead of reduce -> subtract -> reduce.
    """
    n = x.shape[-1]
    inv_n = 1.0 / float(n)
    s1 = jnp.sum(x, axis=-1, keepdims=True)
    s2 = jnp.sum(x * x, axis=-1, keepdims=True)
    mean = s1 * inv_n
    var = jnp.maximum(s2 * inv_n - mean * mean, 0.0)
    inv = jax.lax.rsqrt(var + LN_EPS)
    return (x - mean) * inv * gamma + beta


def actor_kernel(s_ref,
                 w1_ref, b1_ref, g1_ref, be1_ref,
                 w2_ref, b2_ref, g2_ref, be2_ref,
                 w3_ref, b3_ref,
                 out_ref):
    x = s_ref[...].astype(jnp.float32)

    # fc1 -> ln1 -> relu   (weights may be stored bf16; upcast after DMA)
    w1 = w1_ref[...].astype(jnp.float32)
    h = jnp.dot(x, w1, preferred_element_type=jnp.float32) + b1_ref[...]
    h = _layernorm_fused(h, g1_ref[...], be1_ref[...])
    h = jnp.maximum(h, 0.0)

    # fc2 -> ln2 -> relu
    w2 = w2_ref[...].astype(jnp.float32)
    h = jnp.dot(h, w2, preferred_element_type=jnp.float32) + b2_ref[...]
    h = _layernorm_fused(h, g2_ref[...], be2_ref[...])
    h = jnp.maximum(h, 0.0)

    # action head (lane-padded to a multiple of 128) -> tanh
    w3 = w3_ref[...].astype(jnp.float32)
    a = jnp.dot(h, w3, preferred_element_type=jnp.float32) + b3_ref[...]
    out_ref[...] = jnp.tanh(a).astype(out_ref.dtype)


def _pick_batch_tile(B):
    """Largest sublane-aligned tile that still gives >=2 grid steps.

    >=2 'parallel' steps lets v7x shard the grid across its 2 TensorCores;
    tiles are capped at 512 rows (well within every chip's VMEM budget for
    these feature widths) and kept a multiple of 8 (sublane height) so the
    MXU/VPU tiles are fully occupied.
    """
    if B <= 8:
        return B
    best = None
    cap = min(B // 2, 512)
    for tb in range(8, cap + 1, 8):
        if B % tb == 0:
            best = tb
    return best if best is not None else B


def _round_up(x, m):
    return ((x + m - 1) // m) * m


def actor_forward(state, params, *, batch_tile=None):
    """Runs the ActorNetwork forward pass via pallas_call.

    state:  [B, state_dim] float32
    params: dict with w1,b1,g1,be1,w2,b2,g2,be2,w3,b3
            (weights already [in, out]; vectors as [1, dim]).
            Weights may be bf16; vectors are f32.
    """
    B, state_dim = state.shape
    fc1_dim = params["w1"].shape[1]
    fc2_dim = params["w2"].shape[1]
    action_dim = params["w3"].shape[1]

    tb = batch_tile or _pick_batch_tile(B)
    assert B % tb == 0, f"batch {B} must be divisible by batch_tile {tb}"
    grid = (B // tb,)

    # Lane-dense output: pad the action head to a multiple of 128 columns so
    # the final store is an unmasked full-lane vst; slice back afterwards.
    a_pad = _round_up(action_dim, 128)
    w3 = params["w3"]
    b3 = params["b3"].astype(jnp.float32)
    if a_pad != action_dim:
        w3 = jnp.pad(w3, ((0, 0), (0, a_pad - action_dim)))
        b3 = jnp.pad(b3, ((0, 0), (0, a_pad - action_dim)))

    def batch_map(i):
        return (i, 0)

    def replicated(i):
        return (0, 0)

    full = lambda shp: pl.BlockSpec(shp, replicated)

    in_specs = [
        pl.BlockSpec((tb, state_dim), batch_map),        # state
        full((state_dim, fc1_dim)),                      # w1
        full((1, fc1_dim)),                              # b1
        full((1, fc1_dim)),                              # ln1 gamma
        full((1, fc1_dim)),                              # ln1 beta
        full((fc1_dim, fc2_dim)),                        # w2
        full((1, fc2_dim)),                              # b2
        full((1, fc2_dim)),                              # ln2 gamma
        full((1, fc2_dim)),                              # ln2 beta
        full((fc2_dim, a_pad)),                          # w3 (lane-padded)
        full((1, a_pad)),                                # b3 (lane-padded)
    ]
    out_spec = pl.BlockSpec((tb, a_pad), batch_map)

    # Conservative VMEM budget: double-buffered state/output tiles + params
    # (double-buffered) + activation temporaries, with 4x headroom for
    # compiler temps, clamped to the 32 MiB scoped default (fits v7x's 64 MiB
    # physical VMEM).
    def _nbytes(x):
        return x.size * x.dtype.itemsize
    param_bytes = sum(_nbytes(params[k]) for k in
                      ("w1", "b1", "g1", "be1", "w2", "b2", "g2", "be2"))
    param_bytes += _nbytes(w3) + _nbytes(b3)
    tile_bytes = 4 * (2 * tb * state_dim            # state, double-buffered
                      + 2 * tb * a_pad              # output, double-buffered
                      + tb * (fc1_dim + fc2_dim))   # hidden activations
    vmem_limit = int(min(max(4 * (tile_bytes + 2 * param_bytes), 2 << 20),
                         32 << 20))

    out_padded = pl.pallas_call(
        actor_kernel,
        out_shape=jax.ShapeDtypeStruct((B, a_pad), jnp.float32),
        grid_spec=pltpu.PrefetchScalarGridSpec(
            num_scalar_prefetch=0,
            grid=grid,
            in_specs=in_specs,
            out_specs=out_spec,
        ),
        compiler_params=pltpu.CompilerParams(
            dimension_semantics=("parallel",),
            vmem_limit_bytes=vmem_limit),
    )(state,
      params["w1"], params["b1"].astype(jnp.float32),
      params["g1"], params["be1"],
      params["w2"], params["b2"].astype(jnp.float32),
      params["g2"], params["be2"],
      w3, b3)

    if a_pad != action_dim:
        return out_padded[:, :action_dim]
    return out_padded


def init_params(key, state_dim, fc1_dim, fc2_dim, action_dim,
                weight_dtype=jnp.bfloat16):
    """Deterministic synthetic init (uniform, roughly nn.Linear scale).

    Weights are stored in `weight_dtype` (bf16 by default, halving DMA bytes);
    biases / LayerNorm params stay f32.
    """
    ks = jax.random.split(key, 6)

    def lin(kw, kb, fan_in, fan_out):
        bound = 1.0 / jnp.sqrt(fan_in)
        w = jax.random.uniform(kw, (fan_in, fan_out), jnp.float32, -bound, bound)
        b = jax.random.uniform(kb, (1, fan_out), jnp.float32, -bound, bound)
        return w.astype(weight_dtype), b

    w1, b1 = lin(ks[0], ks[1], state_dim, fc1_dim)
    w2, b2 = lin(ks[2], ks[3], fc1_dim, fc2_dim)
    w3, b3 = lin(ks[4], ks[5], fc2_dim, action_dim)
    return {
        "w1": w1, "b1": b1,
        "g1": jnp.ones((1, fc1_dim), jnp.float32),
        "be1": jnp.zeros((1, fc1_dim), jnp.float32),
        "w2": w2, "b2": b2,
        "g2": jnp.ones((1, fc2_dim), jnp.float32),
        "be2": jnp.zeros((1, fc2_dim), jnp.float32),
        "w3": w3, "b3": b3,
    }


def actor_forward_ref(state, p):
    """Pure-JAX reference (uses the same bf16-rounded weights, f32 math)."""
    def ln(x, g, b):
        m = jnp.mean(x, -1, keepdims=True)
        v = jnp.mean((x - m) ** 2, -1, keepdims=True)
        return (x - m) * jax.lax.rsqrt(v + LN_EPS) * g + b

    w1 = p["w1"].astype(jnp.float32)
    w2 = p["w2"].astype(jnp.float32)
    w3 = p["w3"].astype(jnp.float32)
    h = jnp.maximum(ln(state @ w1 + p["b1"], p["g1"], p["be1"]), 0.0)
    h = jnp.maximum(ln(h @ w2 + p["b2"], p["g2"], p["be2"]), 0.0)
    return jnp.tanh(h @ w3 + p["b3"])


if __name__ == "__main__":
    key = jax.random.PRNGKey(0)
    k_state, k_params = jax.random.split(key)

    # Small shapes consistent with the module's forward (parking-env sizes),
    # batch chosen so the grid has 2 parallel steps (exercises megacore path).
    B, state_dim, fc1_dim, fc2_dim, action_dim = 256, 8, 32, 32, 2

    state = jax.random.normal(k_state, (B, state_dim), jnp.float32)
    params = init_params(k_params, state_dim, fc1_dim, fc2_dim, action_dim)

    out = actor_forward(state, params)
    out = jax.block_until_ready(out)

    ref = actor_forward_ref(state, params)
    assert out.shape == (B, action_dim)
    assert jnp.allclose(out, ref, atol=1e-5, rtol=1e-5), "mismatch vs reference"

    print("KERNEL_OK")
</pallas_src>

<mosaic_0001>
module attributes {stable_mosaic.version = 11 : i64} {
  func.func @actor_kernel(%arg0: i32, %arg1: memref<128x8xf32, #tpu.memory_space<vmem>>, %arg2: memref<8x32xbf16, #tpu.memory_space<vmem>>, %arg3: memref<1x32xf32, #tpu.memory_space<vmem>>, %arg4: memref<1x32xf32, #tpu.memory_space<vmem>>, %arg5: memref<1x32xf32, #tpu.memory_space<vmem>>, %arg6: memref<32x32xbf16, #tpu.memory_space<vmem>>, %arg7: memref<1x32xf32, #tpu.memory_space<vmem>>, %arg8: memref<1x32xf32, #tpu.memory_space<vmem>>, %arg9: memref<1x32xf32, #tpu.memory_space<vmem>>, %arg10: memref<32x128xbf16, #tpu.memory_space<vmem>>, %arg11: memref<1x128xf32, #tpu.memory_space<vmem>>, %arg12: memref<128x128xf32, #tpu.memory_space<vmem>>) attributes {dimension_semantics = [#tpu.dimension_semantics<parallel>], iteration_bounds = array<i64: 2>, scalar_prefetch = 0 : i64, scratch_operands = 0 : i64, tpu.core_type = #tpu.core_type<tc>, window_params = [{transform_indices = @transform_0, window_bounds = array<i64: 128, 8>}, {pipeline_mode = #tpu.pipeline_mode<synchronous>, transform_indices = @transform_1, window_bounds = array<i64: 8, 32>}, {pipeline_mode = #tpu.pipeline_mode<synchronous>, transform_indices = @transform_2, window_bounds = array<i64: 1, 32>}, {pipeline_mode = #tpu.pipeline_mode<synchronous>, transform_indices = @transform_3, window_bounds = array<i64: 1, 32>}, {pipeline_mode = #tpu.pipeline_mode<synchronous>, transform_indices = @transform_4, window_bounds = array<i64: 1, 32>}, {pipeline_mode = #tpu.pipeline_mode<synchronous>, transform_indices = @transform_5, window_bounds = array<i64: 32, 32>}, {pipeline_mode = #tpu.pipeline_mode<synchronous>, transform_indices = @transform_6, window_bounds = array<i64: 1, 32>}, {pipeline_mode = #tpu.pipeline_mode<synchronous>, transform_indices = @transform_7, window_bounds = array<i64: 1, 32>}, {pipeline_mode = #tpu.pipeline_mode<synchronous>, transform_indices = @transform_8, window_bounds = array<i64: 1, 32>}, {pipeline_mode = #tpu.pipeline_mode<synchronous>, transform_indices = @transform_9, window_bounds = array<i64: 32, 128>}, {pipeline_mode = #tpu.pipeline_mode<synchronous>, transform_indices = @transform_10, window_bounds = array<i64: 1, 128>}, {transform_indices = @transform_11, window_bounds = array<i64: 128, 128>}]} {
    %c0 = arith.constant 0 : index
    %c0_0 = arith.constant 0 : index
    %0 = vector.load %arg1[%c0, %c0_0] : memref<128x8xf32, #tpu.memory_space<vmem>>, vector<128x8xf32>
    %c0_1 = arith.constant 0 : index
    %c0_2 = arith.constant 0 : index
    %1 = vector.load %arg2[%c0_1, %c0_2] : memref<8x32xbf16, #tpu.memory_space<vmem>>, vector<8x32xbf16>
    %2 = arith.extf %1 : vector<8x32xbf16> to vector<8x32xf32>
    %cst = arith.constant dense<0.000000e+00> : vector<128x32xf32>
    %3 = tpu.matmul %0, %2, %cst {dimension_numbers = #tpu.dot_dimension_numbers<[1], [0], [0], [1], [0, 0, 1, 1], [], []>} : vector<128x8xf32>, vector<8x32xf32>, vector<128x32xf32> -> vector<128x32xf32>
    %c0_3 = arith.constant 0 : index
    %c0_4 = arith.constant 0 : index
    %4 = vector.load %arg3[%c0_3, %c0_4] : memref<1x32xf32, #tpu.memory_space<vmem>>, vector<1x32xf32>
    %5 = vector.broadcast %4 : vector<1x32xf32> to vector<128x32xf32>
    %6 = arith.addf %3, %5 : vector<128x32xf32>
    %c0_5 = arith.constant 0 : index
    %c0_6 = arith.constant 0 : index
    %7 = vector.load %arg4[%c0_5, %c0_6] : memref<1x32xf32, #tpu.memory_space<vmem>>, vector<1x32xf32>
    %c0_7 = arith.constant 0 : index
    %c0_8 = arith.constant 0 : index
    %8 = vector.load %arg5[%c0_7, %c0_8] : memref<1x32xf32, #tpu.memory_space<vmem>>, vector<1x32xf32>
    %cst_9 = arith.constant dense<0.000000e+00> : vector<128xf32>
    %9 = vector.multi_reduction <add>, %6, %cst_9 [1] : vector<128x32xf32> to vector<128xf32>
    %10 = vector.shape_cast %9 : vector<128xf32> to vector<128x1xf32>
    %11 = arith.mulf %6, %6 : vector<128x32xf32>
    %cst_10 = arith.constant dense<0.000000e+00> : vector<128xf32>
    %12 = vector.multi_reduction <add>, %11, %cst_10 [1] : vector<128x32xf32> to vector<128xf32>
    %13 = vector.shape_cast %12 : vector<128xf32> to vector<128x1xf32>
    %cst_11 = arith.constant 3.125000e-02 : f32
    %14 = vector.broadcast %cst_11 : f32 to vector<128x1xf32>
    %15 = arith.mulf %10, %14 : vector<128x1xf32>
    %cst_12 = arith.constant 3.125000e-02 : f32
    %16 = vector.broadcast %cst_12 : f32 to vector<128x1xf32>
    %17 = arith.mulf %13, %16 : vector<128x1xf32>
    %18 = arith.mulf %15, %15 : vector<128x1xf32>
    %19 = arith.subf %17, %18 : vector<128x1xf32>
    %cst_13 = arith.constant 0.000000e+00 : f32
    %20 = vector.broadcast %cst_13 : f32 to vector<128x1xf32>
    %21 = arith.maximumf %19, %20 : vector<128x1xf32>
    %cst_14 = arith.constant 9.99999974E-6 : f32
    %22 = vector.broadcast %cst_14 : f32 to vector<128x1xf32>
    %23 = arith.addf %21, %22 : vector<128x1xf32>
    %24 = math.rsqrt %23 : vector<128x1xf32>
    %25 = vector.broadcast %15 : vector<128x1xf32> to vector<128x32xf32>
    %26 = arith.subf %6, %25 : vector<128x32xf32>
    %27 = vector.broadcast %24 : vector<128x1xf32> to vector<128x32xf32>
    %28 = arith.mulf %26, %27 : vector<128x32xf32>
    %29 = vector.broadcast %7 : vector<1x32xf32> to vector<128x32xf32>
    %30 = arith.mulf %28, %29 : vector<128x32xf32>
    %31 = vector.broadcast %8 : vector<1x32xf32> to vector<128x32xf32>
    %32 = arith.addf %30, %31 : vector<128x32xf32>
    %cst_15 = arith.constant 0.000000e+00 : f32
    %33 = vector.broadcast %cst_15 : f32 to vector<128x32xf32>
    %34 = arith.maximumf %32, %33 : vector<128x32xf32>
    %c0_16 = arith.constant 0 : index
    %c0_17 = arith.constant 0 : index
    %35 = vector.load %arg6[%c0_16, %c0_17] : memref<32x32xbf16, #tpu.memory_space<vmem>>, vector<32x32xbf16>
    %36 = arith.extf %35 : vector<32x32xbf16> to vector<32x32xf32>
    %cst_18 = arith.constant dense<0.000000e+00> : vector<128x32xf32>
    %37 = tpu.matmul %34, %36, %cst_18 {dimension_numbers = #tpu.dot_dimension_numbers<[1], [0], [0], [1], [0, 0, 1, 1], [], []>} : vector<128x32xf32>, vector<32x32xf32>, vector<128x32xf32> -> vector<128x32xf32>
    %c0_19 = arith.constant 0 : index
    %c0_20 = arith.constant 0 : index
    %38 = vector.load %arg7[%c0_19, %c0_20] : memref<1x32xf32, #tpu.memory_space<vmem>>, vector<1x32xf32>
    %39 = vector.broadcast %38 : vector<1x32xf32> to vector<128x32xf32>
    %40 = arith.addf %37, %39 : vector<128x32xf32>
    %c0_21 = arith.constant 0 : index
    %c0_22 = arith.constant 0 : index
    %41 = vector.load %arg8[%c0_21, %c0_22] : memref<1x32xf32, #tpu.memory_space<vmem>>, vector<1x32xf32>
    %c0_23 = arith.constant 0 : index
    %c0_24 = arith.constant 0 : index
    %42 = vector.load %arg9[%c0_23, %c0_24] : memref<1x32xf32, #tpu.memory_space<vmem>>, vector<1x32xf32>
    %cst_25 = arith.constant dense<0.000000e+00> : vector<128xf32>
    %43 = vector.multi_reduction <add>, %40, %cst_25 [1] : vector<128x32xf32> to vector<128xf32>
    %44 = vector.shape_cast %43 : vector<128xf32> to vector<128x1xf32>
    %45 = arith.mulf %40, %40 : vector<128x32xf32>
    %cst_26 = arith.constant dense<0.000000e+00> : vector<128xf32>
    %46 = vector.multi_reduction <add>, %45, %cst_26 [1] : vector<128x32xf32> to vector<128xf32>
    %47 = vector.shape_cast %46 : vector<128xf32> to vector<128x1xf32>
    %cst_27 = arith.constant 3.125000e-02 : f32
    %48 = vector.broadcast %cst_27 : f32 to vector<128x1xf32>
    %49 = arith.mulf %44, %48 : vector<128x1xf32>
    %cst_28 = arith.constant 3.125000e-02 : f32
    %50 = vector.broadcast %cst_28 : f32 to vector<128x1xf32>
    %51 = arith.mulf %47, %50 : vector<128x1xf32>
    %52 = arith.mulf %49, %49 : vector<128x1xf32>
    %53 = arith.subf %51, %52 : vector<128x1xf32>
    %cst_29 = arith.constant 0.000000e+00 : f32
    %54 = vector.broadcast %cst_29 : f32 to vector<128x1xf32>
    %55 = arith.maximumf %53, %54 : vector<128x1xf32>
    %cst_30 = arith.constant 9.99999974E-6 : f32
    %56 = vector.broadcast %cst_30 : f32 to vector<128x1xf32>
    %57 = arith.addf %55, %56 : vector<128x1xf32>
    %58 = math.rsqrt %57 : vector<128x1xf32>
    %59 = vector.broadcast %49 : vector<128x1xf32> to vector<128x32xf32>
    %60 = arith.subf %40, %59 : vector<128x32xf32>
    %61 = vector.broadcast %58 : vector<128x1xf32> to vector<128x32xf32>
    %62 = arith.mulf %60, %61 : vector<128x32xf32>
    %63 = vector.broadcast %41 : vector<1x32xf32> to vector<128x32xf32>
    %64 = arith.mulf %62, %63 : vector<128x32xf32>
    %65 = vector.broadcast %42 : vector<1x32xf32> to vector<128x32xf32>
    %66 = arith.addf %64, %65 : vector<128x32xf32>
    %cst_31 = arith.constant 0.000000e+00 : f32
    %67 = vector.broadcast %cst_31 : f32 to vector<128x32xf32>
    %68 = arith.maximumf %66, %67 : vector<128x32xf32>
    %c0_32 = arith.constant 0 : index
    %c0_33 = arith.constant 0 : index
    %69 = vector.load %arg10[%c0_32, %c0_33] : memref<32x128xbf16, #tpu.memory_space<vmem>>, vector<32x128xbf16>
    %70 = arith.extf %69 : vector<32x128xbf16> to vector<32x128xf32>
    %cst_34 = arith.constant dense<0.000000e+00> : vector<128x128xf32>
    %71 = tpu.matmul %68, %70, %cst_34 {dimension_numbers = #tpu.dot_dimension_numbers<[1], [0], [0], [1], [0, 0, 1, 1], [], []>} : vector<128x32xf32>, vector<32x128xf32>, vector<128x128xf32> -> vector<128x128xf32>
    %c0_35 = arith.constant 0 : index
    %c0_36 = arith.constant 0 : index
    %72 = vector.load %arg11[%c0_35, %c0_36] : memref<1x128xf32, #tpu.memory_space<vmem>>, vector<1x128xf32>
    %73 = vector.broadcast %72 : vector<1x128xf32> to vector<128x128xf32>
    %74 = arith.addf %71, %73 : vector<128x128xf32>
    %75 = math.tanh %74 : vector<128x128xf32>
    %c0_37 = arith.constant 0 : index
    %c0_38 = arith.constant 0 : index
    %76 = vector.load %arg12[%c0_37, %c0_38] : memref<128x128xf32, #tpu.memory_space<vmem>>, vector<128x128xf32>
    tpu.vector_store %arg12[%c0_37, %c0_38], %75 {strides = array<i32>} : memref<128x128xf32, #tpu.memory_space<vmem>>, vector<128x128xf32>,
    return
  }
  func.func @transform_0(%arg0: i32) -> (i32, i32) {
    %c0_i32 = arith.constant 0 : i32
    %c0_i32_0 = arith.constant 0 : i32
    return %arg0, %c0_i32 : i32, i32
  }
  func.func @transform_1(%arg0: i32) -> (i32, i32) {
    %c0_i32 = arith.constant 0 : i32
    %c0_i32_0 = arith.constant 0 : i32
    %c0_i32_1 = arith.constant 0 : i32
    return %c0_i32, %c0_i32_0 : i32, i32
  }
  func.func @transform_2(%arg0: i32) -> (i32, i32) {
    %c0_i32 = arith.constant 0 : i32
    %c0_i32_0 = arith.constant 0 : i32
    %c0_i32_1 = arith.constant 0 : i32
    return %c0_i32, %c0_i32_0 : i32, i32
  }
  func.func @transform_3(%arg0: i32) -> (i32, i32) {
    %c0_i32 = arith.constant 0 : i32
    %c0_i32_0 = arith.constant 0 : i32
    %c0_i32_1 = arith.constant 0 : i32
    return %c0_i32, %c0_i32_0 : i32, i32
  }
  func.func @transform_4(%arg0: i32) -> (i32, i32) {
    %c0_i32 = arith.constant 0 : i32
    %c0_i32_0 = arith.constant 0 : i32
    %c0_i32_1 = arith.constant 0 : i32
    return %c0_i32, %c0_i32_0 : i32, i32
  }
  func.func @transform_5(%arg0: i32) -> (i32, i32) {
    %c0_i32 = arith.constant 0 : i32
    %c0_i32_0 = arith.constant 0 : i32
    %c0_i32_1 = arith.constant 0 : i32
    return %c0_i32, %c0_i32_0 : i32, i32
  }
  func.func @transform_6(%arg0: i32) -> (i32, i32) {
    %c0_i32 = arith.constant 0 : i32
    %c0_i32_0 = arith.constant 0 : i32
    %c0_i32_1 = arith.constant 0 : i32
    return %c0_i32, %c0_i32_0 : i32, i32
  }
  func.func @transform_7(%arg0: i32) -> (i32, i32) {
    %c0_i32 = arith.constant 0 : i32
    %c0_i32_0 = arith.constant 0 : i32
    %c0_i32_1 = arith.constant 0 : i32
    return %c0_i32, %c0_i32_0 : i32, i32
  }
  func.func @transform_8(%arg0: i32) -> (i32, i32) {
    %c0_i32 = arith.constant 0 : i32
    %c0_i32_0 = arith.constant 0 : i32
    %c0_i32_1 = arith.constant 0 : i32
    return %c0_i32, %c0_i32_0 : i32, i32
  }
  func.func @transform_9(%arg0: i32) -> (i32, i32) {
    %c0_i32 = arith.constant 0 : i32
    %c0_i32_0 = arith.constant 0 : i32
    %c0_i32_1 = arith.constant 0 : i32
    return %c0_i32, %c0_i32_0 : i32, i32
  }
  func.func @transform_10(%arg0: i32) -> (i32, i32) {
    %c0_i32 = arith.constant 0 : i32
    %c0_i32_0 = arith.constant 0 : i32
    %c0_i32_1 = arith.constant 0 : i32
    return %c0_i32, %c0_i32_0 : i32, i32
  }
  func.func @transform_11(%arg0: i32) -> (i32, i32) {
    %c0_i32 = arith.constant 0 : i32
    %c0_i32_0 = arith.constant 0 : i32
    return %arg0, %c0_i32 : i32, i32
  }
}

</mosaic_0001>

<llo_original>
// kernel: tpu_custom_call.1
$region0: #{tpu_custom_call.1}
  #allocation0 [shape = 'u32[]', space=smem, size = 0x4, offset = 0x4, fixed_abs, tag = 'smem constant byte address 0x4 - core index']
  #allocation1 [shape = 'u32[144,128]{1,0:T(1,128)}', space=vmem, size = 0x12000, scoped, tag = 'internal scratch']
  %s0 = inlined_call_operand.vmem [shape: f32[256,8], index: 0, kind: input, shape index: {}]
  %s1 = inlined_call_operand.vmem [shape: bf16[8,32], index: 1, kind: input, shape index: {}]
  %s2 = inlined_call_operand.vmem [shape: f32[1,32], index: 2, kind: input, shape index: {}]
  %s3 = inlined_call_operand.vmem [shape: f32[1,32], index: 3, kind: input, shape index: {}]
  %s4 = inlined_call_operand.vmem [shape: f32[1,32], index: 4, kind: input, shape index: {}]
  %s5 = inlined_call_operand.vmem [shape: bf16[32,32], index: 5, kind: input, shape index: {}]
  %s6 = inlined_call_operand.vmem [shape: f32[1,32], index: 6, kind: input, shape index: {}]
  %s7 = inlined_call_operand.vmem [shape: f32[1,32], index: 7, kind: input, shape index: {}]
  %s8 = inlined_call_operand.vmem [shape: f32[1,32], index: 8, kind: input, shape index: {}]
  %s9 = inlined_call_operand.vmem [shape: bf16[32,128], index: 9, kind: input, shape index: {}]
  %s10 = inlined_call_operand.vmem [shape: f32[1,128], index: 10, kind: input, shape index: {}]
  %s11 = inlined_call_operand.hbm [shape: f32[256,128], index: 11, kind: output, shape index: {}]
  %s12 = sld [smem:[#allocation0]]
  $region77: #{tpu_custom_call.1} parent=0
    _
  %s14 = ssub.s32 1, %s12
  %s15 = scalar_select 0, %s14, %s12
  $region1: #{tpu_custom_call.1} parent=0
    #allocation2 [shape = 'u8[131072]{0}', space=vmem, size = 0x20000, scoped, tag = 'output window, operand 0']
    #allocation3 [shape = 's32[2]{0}', space=sflag, size = 0x8, scoped, tag = 'scoped memory for tpu_custom_call.1']
    %16 = vsyncpa [#allocation3], 0
    %s17 = scalar_lea.sflag [#allocation3], 1
    %18 = vsyncpa %s17, 0
    loop: start=0, step=1, limit=4
    $region2: #{tpu_custom_call.1} parent=1 // loop_pre_header
      _
    $region3: #{tpu_custom_call.1} parent=1 // loop_header
      %s20 = sphi 0, %s24
      %p21 = scmp.ge.s32.totalorder %s20, 4
      %s30 = sphi 0, %s32
      %s33 = sphi 0, %s30
      %s34 = sphi 0, %s33
      %s50 = sphi 0, %s34
      %s54 = sphi 0, %s54
      %s56 = sphi 0, %s54
      %s57 = sphi 0, %s56
      %s71 = sphi 0, %s57
      %s75 = sphi 0, %s75
      %s77 = sphi 0, %s75
      %s78 = sphi 0, %s77
      %s92 = sphi 0, %s78
      %s96 = sphi 0, %s96
      %s98 = sphi 0, %s96
      %s99 = sphi 0, %s98
      %s113 = sphi 0, %s99
      %s117 = sphi 0, %s117
      %s119 = sphi 0, %s117
      %s120 = sphi 0, %s119
      %s134 = sphi 0, %s120
      %s138 = sphi 0, %s138
      %s140 = sphi 0, %s138
      %s141 = sphi 0, %s140
      %s155 = sphi 0, %s141
      %s159 = sphi 0, %s159
      %s161 = sphi 0, %s159
      %s162 = sphi 0, %s161
      %s176 = sphi 0, %s162
      %s180 = sphi 0, %s180
      %s182 = sphi 0, %s180
      %s183 = sphi 0, %s182
      %s197 = sphi 0, %s183
      %s201 = sphi 0, %s201
      %s203 = sphi 0, %s201
      %s204 = sphi 0, %s203
      %s218 = sphi 0, %s204
      %s222 = sphi 0, %s222
      %s224 = sphi 0, %s222
      %s225 = sphi 0, %s224
      %s239 = sphi 0, %s225
      %s243 = sphi 0, %s243
      %s245 = sphi 0, %s243
      %s246 = sphi 0, %s245
      %s260 = sphi 0, %s246
      %s266 = sphi 0, %s268
      %s269 = sphi 0, %s266
      %s270 = sphi 0, %s269
      %s286 = sphi 0, %s270
    $region4: #{tpu_custom_call.1} parent=1 // loop_header_branch
      %23 = sbr.rel (%p21) target = $region8
    $region5: #{tpu_custom_call.1} parent=1 // loop_body
      %s25 = ssub.s32 %s20, 1
      %s26 = ssub.s32 %s20, 2
      %s27 = sadd.s32 %s20, 1
      %s28 = ssub.s32 %s20, %s27
      %p29 = scmp.eq.s32.totalorder %s28, 0
      %s31 = sadd.s32 %s30, 1
      %s32 = scalar_select %p29, %s30, %s31
      %p35 = pneg %p29
      %p36 = scmp.eq.s32.totalorder %s20, 1
      %p37 = por %p35, %p36
      %p38 = scmp.ne.s32.totalorder %s30, %s33
      %p39 = scmp.eq.s32.totalorder %s20, 0
      %p40 = por %p38, %p39
      %p41 = scmp.ne.s32.totalorder %s30, %s33
      %p42 = scmp.eq.s32.totalorder %s25, 1
      %p43 = por %p41, %p42
      %p44 = scmp.ne.s32.totalorder %s33, %s34
      %p45 = scmp.eq.s32.totalorder %s25, 0
      %p46 = por %p44, %p45
      %p47 = scmp.ne.s32.totalorder %s33, %s34
      %p48 = scmp.eq.s32.totalorder %s26, 1
      %p49 = por %p47, %p48
      %p51 = scmp.ne.s32.totalorder %s34, %s50
      %p52 = scmp.eq.s32.totalorder %s26, 0
      %p53 = por %p51, %p52
      %s55 = sadd.s32 %s54, 1
      %p58 = scmp.eq.s32.totalorder %s20, 1
      %p59 = scmp.ne.s32.totalorder %s54, %s56
      %p60 = scmp.eq.s32.totalorder %s20, 0
      %p61 = por %p59, %p60
      %p62 = scmp.ne.s32.totalorder %s54, %s56
      %p63 = scmp.eq.s32.totalorder %s25, 1
      %p64 = por %p62, %p63
      %p65 = scmp.ne.s32.totalorder %s56, %s57
      %p66 = scmp.eq.s32.totalorder %s25, 0
      %p67 = por %p65, %p66
      %p68 = scmp.ne.s32.totalorder %s56, %s57
      %p69 = scmp.eq.s32.totalorder %s26, 1
      %p70 = por %p68, %p69
      %p72 = scmp.ne.s32.totalorder %s57, %s71
      %p73 = scmp.eq.s32.totalorder %s26, 0
      %p74 = por %p72, %p73
      %s76 = sadd.s32 %s75, 1
      %p79 = scmp.eq.s32.totalorder %s20, 1
      %p80 = scmp.ne.s32.totalorder %s75, %s77
      %p81 = scmp.eq.s32.totalorder %s20, 0
      %p82 = por %p80, %p81
      %p83 = scmp.ne.s32.totalorder %s75, %s77
      %p84 = scmp.eq.s32.totalorder %s25, 1
      %p85 = por %p83, %p84
      %p86 = scmp.ne.s32.totalorder %s77, %s78
      %p87 = scmp.eq.s32.totalorder %s25, 0
      %p88 = por %p86, %p87
      %p89 = scmp.ne.s32.totalorder %s77, %s78
      %p90 = scmp.eq.s32.totalorder %s26, 1
      %p91 = por %p89, %p90
      %p93 = scmp.ne.s32.totalorder %s78, %s92
      %p94 = scmp.eq.s32.totalorder %s26, 0
      %p95 = por %p93, %p94
      %s97 = sadd.s32 %s96, 1
      %p100 = scmp.eq.s32.totalorder %s20, 1
      %p101 = scmp.ne.s32.totalorder %s96, %s98
      %p102 = scmp.eq.s32.totalorder %s20, 0
      %p103 = por %p101, %p102
      %p104 = scmp.ne.s32.totalorder %s96, %s98
      %p105 = scmp.eq.s32.totalorder %s25, 1
      %p106 = por %p104, %p105
      %p107 = scmp.ne.s32.totalorder %s98, %s99
      %p108 = scmp.eq.s32.totalorder %s25, 0
      %p109 = por %p107, %p108
      %p110 = scmp.ne.s32.totalorder %s98, %s99
      %p111 = scmp.eq.s32.totalorder %s26, 1
      %p112 = por %p110, %p111
      %p114 = scmp.ne.s32.totalorder %s99, %s113
      %p115 = scmp.eq.s32.totalorder %s26, 0
      %p116 = por %p114, %p115
      %s118 = sadd.s32 %s117, 1
      %p121 = scmp.eq.s32.totalorder %s20, 1
      %p122 = scmp.ne.s32.totalorder %s117, %s119
      %p123 = scmp.eq.s32.totalorder %s20, 0
      %p124 = por %p122, %p123
      %p125 = scmp.ne.s32.totalorder %s117, %s119
      %p126 = scmp.eq.s32.totalorder %s25, 1
      %p127 = por %p125, %p126
      %p128 = scmp.ne.s32.totalorder %s119, %s120
      %p129 = scmp.eq.s32.totalorder %s25, 0
      %p130 = por %p128, %p129
      %p131 = scmp.ne.s32.totalorder %s119, %s120
      %p132 = scmp.eq.s32.totalorder %s26, 1
      %p133 = por %p131, %p132
      %p135 = scmp.ne.s32.totalorder %s120, %s134
      %p136 = scmp.eq.s32.totalorder %s26, 0
      %p137 = por %p135, %p136
      %s139 = sadd.s32 %s138, 1
      %p142 = scmp.eq.s32.totalorder %s20, 1
      %p143 = scmp.ne.s32.totalorder %s138, %s140
      %p144 = scmp.eq.s32.totalorder %s20, 0
      %p145 = por %p143, %p144
      %p146 = scmp.ne.s32.totalorder %s138, %s140
      %p147 = scmp.eq.s32.totalorder %s25, 1
      %p148 = por %p146, %p147
      %p149 = scmp.ne.s32.totalorder %s140, %s141
      %p150 = scmp.eq.s32.totalorder %s25, 0
      %p151 = por %p149, %p150
      %p152 = scmp.ne.s32.totalorder %s140, %s141
      %p153 = scmp.eq.s32.totalorder %s26, 1
      %p154 = por %p152, %p153
      %p156 = scmp.ne.s32.totalorder %s141, %s155
      %p157 = scmp.eq.s32.totalorder %s26, 0
      %p158 = por %p156, %p157
      %s160 = sadd.s32 %s159, 1
      %p163 = scmp.eq.s32.totalorder %s20, 1
      %p164 = scmp.ne.s32.totalorder %s159, %s161
      %p165 = scmp.eq.s32.totalorder %s20, 0
      %p166 = por %p164, %p165
      %p167 = scmp.ne.s32.totalorder %s159, %s161
      %p168 = scmp.eq.s32.totalorder %s25, 1
      %p169 = por %p167, %p168
      %p170 = scmp.ne.s32.totalorder %s161, %s162
      %p171 = scmp.eq.s32.totalorder %s25, 0
      %p172 = por %p170, %p171
      %p173 = scmp.ne.s32.totalorder %s161, %s162
      %p174 = scmp.eq.s32.totalorder %s26, 1
      %p175 = por %p173, %p174
      %p177 = scmp.ne.s32.totalorder %s162, %s176
      %p178 = scmp.eq.s32.totalorder %s26, 0
      %p179 = por %p177, %p178
      %s181 = sadd.s32 %s180, 1
      %p184 = scmp.eq.s32.totalorder %s20, 1
      %p185 = scmp.ne.s32.totalorder %s180, %s182
      %p186 = scmp.eq.s32.totalorder %s20, 0
      %p187 = por %p185, %p186
      %p188 = scmp.ne.s32.totalorder %s180, %s182
      %p189 = scmp.eq.s32.totalorder %s25, 1
      %p190 = por %p188, %p189
      %p191 = scmp.ne.s32.totalorder %s182, %s183
      %p192 = scmp.eq.s32.totalorder %s25, 0
      %p193 = por %p191, %p192
      %p194 = scmp.ne.s32.totalorder %s182, %s183
      %p195 = scmp.eq.s32.totalorder %s26, 1
      %p196 = por %p194, %p195
      %p198 = scmp.ne.s32.totalorder %s183, %s197
      %p199 = scmp.eq.s32.totalorder %s26, 0
      %p200 = por %p198, %p199
      %s202 = sadd.s32 %s201, 1
      %p205 = scmp.eq.s32.totalorder %s20, 1
      %p206 = scmp.ne.s32.totalorder %s201, %s203
      %p207 = scmp.eq.s32.totalorder %s20, 0
      %p208 = por %p206, %p207
      %p209 = scmp.ne.s32.totalorder %s201, %s203
      %p210 = scmp.eq.s32.totalorder %s25, 1
      %p211 = por %p209, %p210
      %p212 = scmp.ne.s32.totalorder %s203, %s204
      %p213 = scmp.eq.s32.totalorder %s25, 0
      %p214 = por %p212, %p213
      %p215 = scmp.ne.s32.totalorder %s203, %s204
      %p216 = scmp.eq.s32.totalorder %s26, 1
      %p217 = por %p215, %p216
      %p219 = scmp.ne.s32.totalorder %s204, %s218
      %p220 = scmp.eq.s32.totalorder %s26, 0
      %p221 = por %p219, %p220
      %s223 = sadd.s32 %s222, 1
      %p226 = scmp.eq.s32.totalorder %s20, 1
      %p227 = scmp.ne.s32.totalorder %s222, %s224
      %p228 = scmp.eq.s32.totalorder %s20, 0
      %p229 = por %p227, %p228
      %p230 = scmp.ne.s32.totalorder %s222, %s224
      %p231 = scmp.eq.s32.totalorder %s25, 1
      %p232 = por %p230, %p231
      %p233 = scmp.ne.s32.totalorder %s224, %s225
      %p234 = scmp.eq.s32.totalorder %s25, 0
      %p235 = por %p233, %p234
      %p236 = scmp.ne.s32.totalorder %s224, %s225
      %p237 = scmp.eq.s32.totalorder %s26, 1
      %p238 = por %p236, %p237
      %p240 = scmp.ne.s32.totalorder %s225, %s239
      %p241 = scmp.eq.s32.totalorder %s26, 0
      %p242 = por %p240, %p241
      %s244 = sadd.s32 %s243, 1
      %p247 = scmp.eq.s32.totalorder %s20, 1
      %p248 = scmp.ne.s32.totalorder %s243, %s245
      %p249 = scmp.eq.s32.totalorder %s20, 0
      %p250 = por %p248, %p249
      %p251 = scmp.ne.s32.totalorder %s243, %s245
      %p252 = scmp.eq.s32.totalorder %s25, 1
      %p253 = por %p251, %p252
      %p254 = scmp.ne.s32.totalorder %s245, %s246
      %p255 = scmp.eq.s32.totalorder %s25, 0
      %p256 = por %p254, %p255
      %p257 = scmp.ne.s32.totalorder %s245, %s246
      %p258 = scmp.eq.s32.totalorder %s26, 1
      %p259 = por %p257, %p258
      %p261 = scmp.ne.s32.totalorder %s246, %s260
      %p262 = scmp.eq.s32.totalorder %s26, 0
      %p263 = por %p261, %p262
      %s264 = ssub.s32 %s20, %s27
      %p265 = scmp.eq.s32.totalorder %s264, 0
      %s267 = sadd.s32 %s266, 1
      %s268 = scalar_select %p265, %s266, %s267
      %p271 = pneg %p265
      %p272 = scmp.eq.s32.totalorder %s20, 1
      %p273 = por %p271, %p272
      %p274 = scmp.ne.s32.totalorder %s266, %s269
      %p275 = scmp.eq.s32.totalorder %s20, 0
      %p276 = por %p274, %p275
      %p277 = scmp.ne.s32.totalorder %s266, %s269
      %p278 = scmp.eq.s32.totalorder %s25, 1
      %p279 = por %p277, %p278
      %p280 = scmp.ne.s32.totalorder %s269, %s270
      %p281 = scmp.eq.s32.totalorder %s25, 0
      %p282 = por %p280, %p281
      %p283 = scmp.ne.s32.totalorder %s269, %s270
      %p284 = scmp.eq.s32.totalorder %s26, 1
      %p285 = por %p283, %p284
      %p287 = scmp.ne.s32.totalorder %s270, %s286
      %p288 = scmp.eq.s32.totalorder %s26, 0
      %p289 = por %p287, %p288
      %p290 = scmp.le.s32.totalorder 1, %s20
      %p291 = scmp.lt.s32.totalorder %s20, 3
      %p292 = pnand %p290, %p291
      %p293 = pneg %p292
      // Predicated region
      $region9: #{tpu_custom_call.1} parent=5 // pred_check
        _
      $region10: #{tpu_custom_call.1} parent=5 // pred_check_branch
        %295 = sbr.rel (%p292) target = $region12
      $region11: #{tpu_custom_call.1} parent=5 // pred_region
        %s296 = ssub.s32 %s20, 1
        // Predicated region
        $region13: #{tpu_custom_call.1} parent=11 // pred_check
          %p297 = pneg %p67
        $region14: #{tpu_custom_call.1} parent=11 // pred_check_branch
          %299 = sbr.rel (%p297) target = $region16
        $region15: #{tpu_custom_call.1} parent=11 // pred_region
          _
        $region16: #{tpu_custom_call.1} parent=11 // pred_fallthru
          _
        // Predicated region
        $region17: #{tpu_custom_call.1} parent=11 // pred_check
          %p300 = pneg %p88
        $region18: #{tpu_custom_call.1} parent=11 // pred_check_branch
          %302 = sbr.rel (%p300) target = $region20
        $region19: #{tpu_custom_call.1} parent=11 // pred_region
          _
        $region20: #{tpu_custom_call.1} parent=11 // pred_fallthru
          _
        // Predicated region
        $region21: #{tpu_custom_call.1} parent=11 // pred_check
          %p303 = pneg %p109
        $region22: #{tpu_custom_call.1} parent=11 // pred_check_branch
          %305 = sbr.rel (%p303) target = $region24
        $region23: #{tpu_custom_call.1} parent=11 // pred_region
          _
        $region24: #{tpu_custom_call.1} parent=11 // pred_fallthru
          _
        // Predicated region
        $region25: #{tpu_custom_call.1} parent=11 // pred_check
          %p306 = pneg %p130
        $region26: #{tpu_custom_call.1} parent=11 // pred_check_branch
          %308 = sbr.rel (%p306) target = $region28
        $region27: #{tpu_custom_call.1} parent=11 // pred_region
          _
        $region28: #{tpu_custom_call.1} parent=11 // pred_fallthru
          _
        // Predicated region
        $region29: #{tpu_custom_call.1} parent=11 // pred_check
          %p309 = pneg %p151
        $region30: #{tpu_custom_call.1} parent=11 // pred_check_branch
          %311 = sbr.rel (%p309) target = $region32
        $region31: #{tpu_custom_call.1} parent=11 // pred_region
          _
        $region32: #{tpu_custom_call.1} parent=11 // pred_fallthru
          _
        // Predicated region
        $region33: #{tpu_custom_call.1} parent=11 // pred_check
          %p312 = pneg %p172
        $region34: #{tpu_custom_call.1} parent=11 // pred_check_branch
          %314 = sbr.rel (%p312) target = $region36
        $region35: #{tpu_custom_call.1} parent=11 // pred_region
          _
        $region36: #{tpu_custom_call.1} parent=11 // pred_fallthru
          _
        // Predicated region
        $region37: #{tpu_custom_call.1} parent=11 // pred_check
          %p315 = pneg %p193
        $region38: #{tpu_custom_call.1} parent=11 // pred_check_branch
          %317 = sbr.rel (%p315) target = $region40
        $region39: #{tpu_custom_call.1} parent=11 // pred_region
          _
        $region40: #{tpu_custom_call.1} parent=11 // pred_fallthru
          _
        // Predicated region
        $region41: #{tpu_custom_call.1} parent=11 // pred_check
          %p318 = pneg %p214
        $region42: #{tpu_custom_call.1} parent=11 // pred_check_branch
          %320 = sbr.rel (%p318) target = $region44
        $region43: #{tpu_custom_call.1} parent=11 // pred_region
          _
        $region44: #{tpu_custom_call.1} parent=11 // pred_fallthru
          _
        // Predicated region
        $region45: #{tpu_custom_call.1} parent=11 // pred_check
          %p321 = pneg %p235
        $region46: #{tpu_custom_call.1} parent=11 // pred_check_branch
          %323 = sbr.rel (%p321) target = $region48
        $region47: #{tpu_custom_call.1} parent=11 // pred_region
          _
        $region48: #{tpu_custom_call.1} parent=11 // pred_fallthru
          _
        // Predicated region
        $region49: #{tpu_custom_call.1} parent=11 // pred_check
          %p324 = pneg %p256
        $region50: #{tpu_custom_call.1} parent=11 // pred_check_branch
          %326 = sbr.rel (%p324) target = $region52
        $region51: #{tpu_custom_call.1} parent=11 // pred_region
          _
        $region52: #{tpu_custom_call.1} parent=11 // pred_fallthru
          _
      $region12: #{tpu_custom_call.1} parent=5 // pred_fallthru
        _
      %p327 = scmp.lt.s32.totalorder %s20, 2
      // Predicated region
      $region53: #{tpu_custom_call.1} parent=5 // pred_check
        %p328 = pneg %p327
      $region54: #{tpu_custom_call.1} parent=5 // pred_check_branch
        %330 = sbr.rel (%p328) target = $region56
      $region55: #{tpu_custom_call.1} parent=5 // pred_region
        // Predicated region
        $region57: #{tpu_custom_call.1} parent=55 // pred_check
          %p331 = pneg %p40
        $region58: #{tpu_custom_call.1} parent=55 // pred_check_branch
          %333 = sbr.rel (%p331) target = $region60
        $region59: #{tpu_custom_call.1} parent=55 // pred_region
          %s334 = smul.u32 16, %s20
          %p335 = scmp.lt.s32.totalorder %s334, 31
          %s336 = scalar_select %p335, %s334, 31
          %s337 = smul.addr %s336, 8
          %s338 = scalar_lea.vmem %s0, %s337
          %s339 = smul.u32 16, %s20
        $region60: #{tpu_custom_call.1} parent=55 // pred_fallthru
          _
      $region56: #{tpu_custom_call.1} parent=5 // pred_fallthru
        _
      %p340 = scmp.le.s32.totalorder 1, %s20
      %p341 = scmp.lt.s32.totalorder %s20, 3
      %p342 = pnand %p340, %p341
      %p343 = pneg %p342
      // Predicated region
      $region61: #{tpu_custom_call.1} parent=5 // pred_check
        _
      $region62: #{tpu_custom_call.1} parent=5 // pred_check_branch
        %345 = sbr.rel (%p342) target = $region64
      $region63: #{tpu_custom_call.1} parent=5 // pred_region
        %s346 = ssub.s32 %s20, 1
        %s347 = smul.u32 16, %s25
        %p348 = scmp.lt.s32.totalorder %s347, 31
        %s349 = scalar_select %p348, %s347, 31
        %s350 = smul.addr %s349, 8
        %s351 = scalar_lea.vmem %s0, %s350
        %p352 = pneg %p46
        %p353 = pneg %p43
        %p354 = pneg %p67
        %p355 = pneg %p64
        %p356 = pneg %p88
        %p357 = pneg %p85
        %p358 = pneg %p109
        %p359 = pneg %p106
        %p360 = pneg %p130
        %p361 = pneg %p127
        %p362 = pneg %p151
        %p363 = pneg %p148
        %p364 = pneg %p172
        %p365 = pneg %p169
        %p366 = pneg %p193
        %p367 = pneg %p190
        %p368 = pneg %p214
        %p369 = pneg %p211
        %p370 = pneg %p235
        %p371 = pneg %p232
        %p372 = pneg %p256
        %p373 = pneg %p253
        %p374 = pneg %p282
        %p375 = pneg %p279
        %s376 = sand.u32 %s269, 1
        %s377 = scalar_lea.sflag [#allocation3], %s376
        %s378 = sand.u32 %s269, 1
        %s379 = smul.addr %s378, 128
        %s380 = scalar_lea.vmem [#allocation2], %s379
        %s381 = smul.u32 16, %s25
        %p382 = scmp.lt.s32.totalorder %s381, 31
        %s383 = scalar_select %p382, %s381, 31
        %s384 = smul.addr %s383, 8
        %s385 = scalar_lea.vmem %s0, %s384
        %s386 = smul.u32 16, %s25
        %s387 = smul.u32 16, %s25
        %v388 = vld [vmem:[%s385] sm:$0xff]
        %v389 = vld [vmem:[%s385 + $0x8] sm:$0xff]
        %v390 = vld [vmem:[%s385 + $0x10] sm:$0xff]
        %v391 = vld [vmem:[%s385 + $0x18] sm:$0xff]
        %v392 = vld [vmem:[%s385 + $0x20] sm:$0xff]
        %v393 = vld [vmem:[%s385 + $0x28] sm:$0xff]
        %v394 = vld [vmem:[%s385 + $0x30] sm:$0xff]
        %v395 = vld [vmem:[%s385 + $0x38] sm:$0xff]
        %v396 = vld [vmem:[%s385 + $0x40] sm:$0xff]
        %v397 = vld [vmem:[%s385 + $0x48] sm:$0xff]
        %v398 = vld [vmem:[%s385 + $0x50] sm:$0xff]
        %v399 = vld [vmem:[%s385 + $0x58] sm:$0xff]
        %v400 = vld [vmem:[%s385 + $0x60] sm:$0xff]
        %v401 = vld [vmem:[%s385 + $0x68] sm:$0xff]
        %v402 = vld [vmem:[%s385 + $0x70] sm:$0xff]
        %v403 = vld [vmem:[%s385 + $0x78] sm:$0xff]
        %v404 = vld [vmem:[%s1] sm:$0xf]
        %v405 = vunpack.c.l.bf16 %v404
        %v406 = vld [vmem:[%s2] sm:$0x1]
        %v408 = vlaneseq
        %v409 = vshrl.u32 %v408, 7
        %v410 = vsub.s32 0, %v409
        %v411 = vrot.slane %v406, %v410
        %vm413 = vcmask 64512
        %v415 = vsel %vm413, %v388, 0
        %v418 = vsel %vm413, %v389, 0
        %v421 = vsel %vm413, %v390, 0
        %v424 = vsel %vm413, %v391, 0
        %v427 = vsel %vm413, %v392, 0
        %v430 = vsel %vm413, %v393, 0
        %v433 = vsel %vm413, %v394, 0
        %v436 = vsel %vm413, %v395, 0
        %v439 = vsel %vm413, %v396, 0
        %v442 = vsel %vm413, %v397, 0
        %v445 = vsel %vm413, %v398, 0
        %v448 = vsel %vm413, %v399, 0
        %v451 = vsel %vm413, %v400, 0
        %v454 = vsel %vm413, %v401, 0
        %v457 = vsel %vm413, %v402, 0
        %v460 = vsel %vm413, %v403, 0
        %462 = vmatprep.subr.mxu0 0.0
        %463 = vmatpush1.msra.mxu0 %v405
        %464 = vmatprep.subr.mxu0 0.0
        %465 = vmatpush1.msra.mxu0 0.0
        %466 = vmatprep.subr.mxu0 0.0
        %467 = vmatpush1.msra.mxu0 0.0
        %468 = vmatprep.subr.mxu0 0.0
        %469 = vmatpush1.msra.mxu0 0.0
        %470 = vmatprep.subr.mxu0 0.0
        %471 = vmatpush1.msra.mxu0 0.0
        %472 = vmatprep.subr.mxu0 0.0
        %473 = vmatpush1.msra.mxu0 0.0
        %474 = vmatprep.subr.mxu0 0.0
        %475 = vmatpush1.msra.mxu0 0.0
        %476 = vmatprep.subr.mxu0 0.0
        %477 = vmatpush1.msra.mxu0 0.0
        %478 = vmatprep.subr.mxu0 0.0
        %479 = vmatpush1.msra.mxu0 0.0
        %480 = vmatprep.subr.mxu0 0.0
        %481 = vmatpush1.msra.mxu0 0.0
        %482 = vmatprep.subr.mxu0 0.0
        %483 = vmatpush1.msra.mxu0 0.0
        %484 = vmatprep.subr.mxu0 0.0
        %485 = vmatpush1.msra.mxu0 0.0
        %486 = vmatprep.subr.mxu0 0.0
        %487 = vmatpush1.msra.mxu0 0.0
        %488 = vmatprep.subr.mxu0 0.0
        %489 = vmatpush1.msra.mxu0 0.0
        %490 = vmatprep.subr.mxu0 0.0
        %491 = vmatpush1.msra.mxu0 0.0
        %492 = vmatprep.subr.mxu0 0.0
        %493 = vmatpush1.msra.mxu0 0.0
        %494 = vmatprep.subr.mxu0 0.0
        %495 = vmatpush1.msra.mxu0 0.0
        %496 = vmatprep.subr.mxu0 0.0
        %497 = vmatpush1.msra.mxu0 0.0
        %498 = vmatprep.subr.mxu0 0.0
        %499 = vmatpush1.msra.mxu0 0.0
        %500 = vmatprep.subr.mxu0 0.0
        %501 = vmatpush1.msra.mxu0 0.0
        %502 = vmatprep.subr.mxu0 0.0
        %503 = vmatpush1.msra.mxu0 0.0
        %504 = vmatprep.subr.mxu0 0.0
        %505 = vmatpush1.msra.mxu0 0.0
        %506 = vmatprep.subr.mxu0 0.0
        %507 = vmatpush1.msra.mxu0 0.0
        %508 = vmatprep.subr.mxu0 0.0
        %509 = vmatpush1.msra.mxu0 0.0
        %510 = vmatprep.subr.mxu0 0.0
        %511 = vmatpush1.msra.mxu0 0.0
        %512 = vmatprep.subr.mxu0 0.0
        %513 = vmatpush1.msra.mxu0 0.0
        %514 = vmatprep.subr.mxu0 0.0
        %515 = vmatpush1.msra.mxu0 0.0
        %516 = vmatprep.subr.mxu0 0.0
        %517 = vmatpush1.msra.mxu0 0.0
        %518 = vmatprep.subr.mxu0 0.0
        %519 = vmatpush1.msra.mxu0 0.0
        %520 = vmatprep.subr.mxu0 0.0
        %521 = vmatpush1.msra.mxu0 0.0
        %522 = vmatprep.subr.mxu0 0.0
        %523 = vmatpush1.msra.mxu0 0.0
        %524 = vmatprep.subr.mxu0 0.0
        %525 = vmatpush1.msra.mxu0 0.0
        %526 = vmatprep.mubr.f32.mxu0 0.0
        %527 = vmatmul.mubr.f32.gmra.mrb[0].mxu0 %v415
        %v528 = vpop.f32.mrb[0].mxu0
        %v529 = vadd.f32 %v411, %v528
        %v530 = vpop.f32.mrb[0].mxu0
        %531 = vmatprep.mubr.f32.mxu0 0.0
        %532 = vmatmul.mubr.f32.gmra.mrb[0].mxu0 %v418
        %v533 = vpop.f32.mrb[0].mxu0
        %v534 = vadd.f32 %v411, %v533
        %v535 = vpop.f32.mrb[0].mxu0
        %536 = vmatprep.mubr.f32.mxu0 0.0
        %537 = vmatmul.mubr.f32.gmra.mrb[0].mxu0 %v421
        %v538 = vpop.f32.mrb[0].mxu0
        %v539 = vadd.f32 %v411, %v538
        %v540 = vpop.f32.mrb[0].mxu0
        %541 = vmatprep.mubr.f32.mxu0 0.0
        %542 = vmatmul.mubr.f32.gmra.mrb[0].mxu0 %v424
        %v543 = vpop.f32.mrb[0].mxu0
        %v544 = vadd.f32 %v411, %v543
        %v545 = vpop.f32.mrb[0].mxu0
        %546 = vmatprep.mubr.f32.mxu0 0.0
        %547 = vmatmul.mubr.f32.gmra.mrb[0].mxu0 %v427
        %v548 = vpop.f32.mrb[0].mxu0
        %v549 = vadd.f32 %v411, %v548
        %v550 = vpop.f32.mrb[0].mxu0
        %551 = vmatprep.mubr.f32.mxu0 0.0
        %552 = vmatmul.mubr.f32.gmra.mrb[0].mxu0 %v430
        %v553 = vpop.f32.mrb[0].mxu0
        %v554 = vadd.f32 %v411, %v553
        %v555 = vpop.f32.mrb[0].mxu0
        %556 = vmatprep.mubr.f32.mxu0 0.0
        %557 = vmatmul.mubr.f32.gmra.mrb[0].mxu0 %v433
        %v558 = vpop.f32.mrb[0].mxu0
        %v559 = vadd.f32 %v411, %v558
        %v560 = vpop.f32.mrb[0].mxu0
        %561 = vmatprep.mubr.f32.mxu0 0.0
        %562 = vmatmul.mubr.f32.gmra.mrb[0].mxu0 %v436
        %v563 = vpop.f32.mrb[0].mxu0
        %v564 = vadd.f32 %v411, %v563
        %v565 = vpop.f32.mrb[0].mxu0
        %566 = vmatprep.mubr.f32.mxu0 0.0
        %567 = vmatmul.mubr.f32.gmra.mrb[0].mxu0 %v439
        %v568 = vpop.f32.mrb[0].mxu0
        %v569 = vadd.f32 %v411, %v568
        %v570 = vpop.f32.mrb[0].mxu0
        %571 = vmatprep.mubr.f32.mxu0 0.0
        %572 = vmatmul.mubr.f32.gmra.mrb[0].mxu0 %v442
        %v573 = vpop.f32.mrb[0].mxu0
        %v574 = vadd.f32 %v411, %v573
        %v575 = vpop.f32.mrb[0].mxu0
        %576 = vmatprep.mubr.f32.mxu0 0.0
        %577 = vmatmul.mubr.f32.gmra.mrb[0].mxu0 %v445
        %v578 = vpop.f32.mrb[0].mxu0
        %v579 = vadd.f32 %v411, %v578
        %v580 = vpop.f32.mrb[0].mxu0
        %581 = vmatprep.mubr.f32.mxu0 0.0
        %582 = vmatmul.mubr.f32.gmra.mrb[0].mxu0 %v448
        %v583 = vpop.f32.mrb[0].mxu0
        %v584 = vadd.f32 %v411, %v583
        %v585 = vpop.f32.mrb[0].mxu0
        %586 = vmatprep.mubr.f32.mxu0 0.0
        %587 = vmatmul.mubr.f32.gmra.mrb[0].mxu0 %v451
        %v588 = vpop.f32.mrb[0].mxu0
        %v589 = vadd.f32 %v411, %v588
        %v590 = vpop.f32.mrb[0].mxu0
        %591 = vmatprep.mubr.f32.mxu0 0.0
        %592 = vmatmul.mubr.f32.gmra.mrb[0].mxu0 %v454
        %v593 = vpop.f32.mrb[0].mxu0
        %v594 = vadd.f32 %v411, %v593
        %v595 = vpop.f32.mrb[0].mxu0
        %596 = vmatprep.mubr.f32.mxu0 0.0
        %597 = vmatmul.mubr.f32.gmra.mrb[0].mxu0 %v457
        %v598 = vpop.f32.mrb[0].mxu0
        %v599 = vadd.f32 %v411, %v598
        %v600 = vpop.f32.mrb[0].mxu0
        %601 = vmatprep.mubr.f32.mxu0 0.0
        %602 = vmatmul.mubr.f32.gmra.mrb[0].mxu0 %v460
        %v603 = vpop.f32.mrb[0].mxu0
        %v604 = vadd.f32 %v411, %v603
        %v605 = vpop.f32.mrb[0].mxu0
        %606 = vdwg.mxu0
        %v607 = vld [vmem:[%s3] sm:$0x1]
        %v608 = vld [vmem:[%s4] sm:$0x1]
        %vm609 = vcmask 261120
        %v610 = vsel %vm609, %v529, 0.0
        %611 = vadd.xlane.f32.xlu0 %v610
        %v612 = vpop.xlane.xlu0 %611
        %v613 = vsel %vm609, %v534, 0.0
        %614 = vadd.xlane.f32.xlu0 %v613
        %v615 = vpop.xlane.xlu0 %614
        %v616 = vsel %vm609, %v539, 0.0
        %617 = vadd.xlane.f32.xlu0 %v616
        %v618 = vpop.xlane.xlu0 %617
        %v619 = vsel %vm609, %v544, 0.0
        %620 = vadd.xlane.f32.xlu0 %v619
        %v621 = vpop.xlane.xlu0 %620
        %v622 = vsel %vm609, %v549, 0.0
        %623 = vadd.xlane.f32.xlu0 %v622
        %v624 = vpop.xlane.xlu0 %623
        %v625 = vsel %vm609, %v554, 0.0
        %626 = vadd.xlane.f32.xlu0 %v625
        %v627 = vpop.xlane.xlu0 %626
        %v628 = vsel %vm609, %v559, 0.0
        %629 = vadd.xlane.f32.xlu0 %v628
        %v630 = vpop.xlane.xlu0 %629
        %v631 = vsel %vm609, %v564, 0.0
        %632 = vadd.xlane.f32.xlu0 %v631
        %v633 = vpop.xlane.xlu0 %632
        %v634 = vsel %vm609, %v569, 0.0
        %635 = vadd.xlane.f32.xlu0 %v634
        %v636 = vpop.xlane.xlu0 %635
        %v637 = vsel %vm609, %v574, 0.0
        %638 = vadd.xlane.f32.xlu0 %v637
        %v639 = vpop.xlane.xlu0 %638
        %v640 = vsel %vm609, %v579, 0.0
        %641 = vadd.xlane.f32.xlu0 %v640
        %v642 = vpop.xlane.xlu0 %641
        %v643 = vsel %vm609, %v584, 0.0
        %644 = vadd.xlane.f32.xlu0 %v643
        %v645 = vpop.xlane.xlu0 %644
        %v646 = vsel %vm609, %v589, 0.0
        %647 = vadd.xlane.f32.xlu0 %v646
        %v648 = vpop.xlane.xlu0 %647
        %v649 = vsel %vm609, %v594, 0.0
        %650 = vadd.xlane.f32.xlu0 %v649
        %v651 = vpop.xlane.xlu0 %650
        %v652 = vsel %vm609, %v599, 0.0
        %653 = vadd.xlane.f32.xlu0 %v652
        %v654 = vpop.xlane.xlu0 %653
        %v655 = vsel %vm609, %v604, 0.0
        %656 = vadd.xlane.f32.xlu0 %v655
        %v657 = vpop.xlane.xlu0 %656
        %v658 = vmul.f32 %v529, %v529
        %v659 = vmul.f32 %v534, %v534
        %v660 = vmul.f32 %v539, %v539
        %v661 = vmul.f32 %v544, %v544
        %v662 = vmul.f32 %v549, %v549
        %v663 = vmul.f32 %v554, %v554
        %v664 = vmul.f32 %v559, %v559
        %v665 = vmul.f32 %v564, %v564
        %v666 = vmul.f32 %v569, %v569
        %v667 = vmul.f32 %v574, %v574
        %v668 = vmul.f32 %v579, %v579
        %v669 = vmul.f32 %v584, %v584
        %v670 = vmul.f32 %v589, %v589
        %v671 = vmul.f32 %v594, %v594
        %v672 = vmul.f32 %v599, %v599
        %v673 = vmul.f32 %v604, %v604
        %v674 = vsel %vm609, %v658, 0.0
        %675 = vadd.xlane.f32.xlu0 %v674
        %v676 = vpop.xlane.xlu0 %675
        %v677 = vsel %vm609, %v659, 0.0
        %678 = vadd.xlane.f32.xlu0 %v677
        %v679 = vpop.xlane.xlu0 %678
        %v680 = vsel %vm609, %v660, 0.0
        %681 = vadd.xlane.f32.xlu0 %v680
        %v682 = vpop.xlane.xlu0 %681
        %v683 = vsel %vm609, %v661, 0.0
        %684 = vadd.xlane.f32.xlu0 %v683
        %v685 = vpop.xlane.xlu0 %684
        %v686 = vsel %vm609, %v662, 0.0
        %687 = vadd.xlane.f32.xlu0 %v686
        %v688 = vpop.xlane.xlu0 %687
        %v689 = vsel %vm609, %v663, 0.0
        %690 = vadd.xlane.f32.xlu0 %v689
        %v691 = vpop.xlane.xlu0 %690
        %v692 = vsel %vm609, %v664, 0.0
        %693 = vadd.xlane.f32.xlu0 %v692
        %v694 = vpop.xlane.xlu0 %693
        %v695 = vsel %vm609, %v665, 0.0
        %696 = vadd.xlane.f32.xlu0 %v695
        %v697 = vpop.xlane.xlu0 %696
        %v698 = vsel %vm609, %v666, 0.0
        %699 = vadd.xlane.f32.xlu0 %v698
        %v700 = vpop.xlane.xlu0 %699
        %v701 = vsel %vm609, %v667, 0.0
        %702 = vadd.xlane.f32.xlu0 %v701
        %v703 = vpop.xlane.xlu0 %702
        %v704 = vsel %vm609, %v668, 0.0
        %705 = vadd.xlane.f32.xlu0 %v704
        %v706 = vpop.xlane.xlu0 %705
        %v707 = vsel %vm609, %v669, 0.0
        %708 = vadd.xlane.f32.xlu0 %v707
        %v709 = vpop.xlane.xlu0 %708
        %v710 = vsel %vm609, %v670, 0.0
        %711 = vadd.xlane.f32.xlu0 %v710
        %v712 = vpop.xlane.xlu0 %711
        %v713 = vsel %vm609, %v671, 0.0
        %714 = vadd.xlane.f32.xlu0 %v713
        %v715 = vpop.xlane.xlu0 %714
        %v716 = vsel %vm609, %v672, 0.0
        %717 = vadd.xlane.f32.xlu0 %v716
        %v718 = vpop.xlane.xlu0 %717
        %v719 = vsel %vm609, %v673, 0.0
        %720 = vadd.xlane.f32.xlu0 %v719
        %v721 = vpop.xlane.xlu0 %720
        %v722 = vmul.f32 %v612, 0.03125
        %v723 = vmul.f32 %v615, 0.03125
        %v724 = vmul.f32 %v618, 0.03125
        %v725 = vmul.f32 %v621, 0.03125
        %v726 = vmul.f32 %v624, 0.03125
        %v727 = vmul.f32 %v627, 0.03125
        %v728 = vmul.f32 %v630, 0.03125
        %v729 = vmul.f32 %v633, 0.03125
        %v730 = vmul.f32 %v636, 0.03125
        %v731 = vmul.f32 %v639, 0.03125
        %v732 = vmul.f32 %v642, 0.03125
        %v733 = vmul.f32 %v645, 0.03125
        %v734 = vmul.f32 %v648, 0.03125
        %v735 = vmul.f32 %v651, 0.03125
        %v736 = vmul.f32 %v654, 0.03125
        %v737 = vmul.f32 %v657, 0.03125
        %v738 = vmul.f32 %v676, 0.03125
        %v739 = vmul.f32 %v679, 0.03125
        %v740 = vmul.f32 %v682, 0.03125
        %v741 = vmul.f32 %v685, 0.03125
        %v742 = vmul.f32 %v688, 0.03125
        %v743 = vmul.f32 %v691, 0.03125
        %v744 = vmul.f32 %v694, 0.03125
        %v745 = vmul.f32 %v697, 0.03125
        %v746 = vmul.f32 %v700, 0.03125
        %v747 = vmul.f32 %v703, 0.03125
        %v748 = vmul.f32 %v706, 0.03125
        %v749 = vmul.f32 %v709, 0.03125
        %v750 = vmul.f32 %v712, 0.03125
        %v751 = vmul.f32 %v715, 0.03125
        %v752 = vmul.f32 %v718, 0.03125
        %v753 = vmul.f32 %v721, 0.03125
        %v754 = vmul.f32 %v722, %v722
        %v755 = vmul.f32 %v723, %v723
        %v756 = vmul.f32 %v724, %v724
        %v757 = vmul.f32 %v725, %v725
        %v758 = vmul.f32 %v726, %v726
        %v759 = vmul.f32 %v727, %v727
        %v760 = vmul.f32 %v728, %v728
        %v761 = vmul.f32 %v729, %v729
        %v762 = vmul.f32 %v730, %v730
        %v763 = vmul.f32 %v731, %v731
        %v764 = vmul.f32 %v732, %v732
        %v765 = vmul.f32 %v733, %v733
        %v766 = vmul.f32 %v734, %v734
        %v767 = vmul.f32 %v735, %v735
        %v768 = vmul.f32 %v736, %v736
        %v769 = vmul.f32 %v737, %v737
        %v770 = vsub.f32 %v738, %v754
        %v771 = vsub.f32 %v739, %v755
        %v772 = vsub.f32 %v740, %v756
        %v773 = vsub.f32 %v741, %v757
        %v774 = vsub.f32 %v742, %v758
        %v775 = vsub.f32 %v743, %v759
        %v776 = vsub.f32 %v744, %v760
        %v777 = vsub.f32 %v745, %v761
        %v778 = vsub.f32 %v746, %v762
        %v779 = vsub.f32 %v747, %v763
        %v780 = vsub.f32 %v748, %v764
        %v781 = vsub.f32 %v749, %v765
        %v782 = vsub.f32 %v750, %v766
        %v783 = vsub.f32 %v751, %v767
        %v784 = vsub.f32 %v752, %v768
        %v785 = vsub.f32 %v753, %v769
        %v786 = vmax.f32 %v770, 0.0
        %v787 = vmax.f32 %v771, 0.0
        %v788 = vmax.f32 %v772, 0.0
        %v789 = vmax.f32 %v773, 0.0
        %v790 = vmax.f32 %v774, 0.0
        %v791 = vmax.f32 %v775, 0.0
        %v792 = vmax.f32 %v776, 0.0
        %v793 = vmax.f32 %v777, 0.0
        %v794 = vmax.f32 %v778, 0.0
        %v795 = vmax.f32 %v779, 0.0
        %v796 = vmax.f32 %v780, 0.0
        %v797 = vmax.f32 %v781, 0.0
        %v798 = vmax.f32 %v782, 0.0
        %v799 = vmax.f32 %v783, 0.0
        %v800 = vmax.f32 %v784, 0.0
        %v801 = vmax.f32 %v785, 0.0
        %v802 = vadd.f32 %v786, 1e-05
        %v803 = vadd.f32 %v787, 1e-05
        %v804 = vadd.f32 %v788, 1e-05
        %v805 = vadd.f32 %v789, 1e-05
        %v806 = vadd.f32 %v790, 1e-05
        %v807 = vadd.f32 %v791, 1e-05
        %v808 = vadd.f32 %v792, 1e-05
        %v809 = vadd.f32 %v793, 1e-05
        %v810 = vadd.f32 %v794, 1e-05
        %v811 = vadd.f32 %v795, 1e-05
        %v812 = vadd.f32 %v796, 1e-05
        %v813 = vadd.f32 %v797, 1e-05
        %v814 = vadd.f32 %v798, 1e-05
        %v815 = vadd.f32 %v799, 1e-05
        %v816 = vadd.f32 %v800, 1e-05
        %v817 = vadd.f32 %v801, 1e-05
        %v818 = vrsqrt.pop %v802
        %v819 = vrsqrt.pop %v803
        %v820 = vrsqrt.pop %v804
        %v821 = vrsqrt.pop %v805
        %v822 = vrsqrt.pop %v806
        %v823 = vrsqrt.pop %v807
        %v824 = vrsqrt.pop %v808
        %v825 = vrsqrt.pop %v809
        %v826 = vrsqrt.pop %v810
        %v827 = vrsqrt.pop %v811
        %v828 = vrsqrt.pop %v812
        %v829 = vrsqrt.pop %v813
        %v830 = vrsqrt.pop %v814
        %v831 = vrsqrt.pop %v815
        %v832 = vrsqrt.pop %v816
        %v833 = vrsqrt.pop %v817
        %v834 = vsub.f32 %v529, %v722
        %v835 = vsub.f32 %v534, %v723
        %v836 = vsub.f32 %v539, %v724
        %v837 = vsub.f32 %v544, %v725
        %v838 = vsub.f32 %v549, %v726
        %v839 = vsub.f32 %v554, %v727
        %v840 = vsub.f32 %v559, %v728
        %v841 = vsub.f32 %v564, %v729
        %v842 = vsub.f32 %v569, %v730
        %v843 = vsub.f32 %v574, %v731
        %v844 = vsub.f32 %v579, %v732
        %v845 = vsub.f32 %v584, %v733
        %v846 = vsub.f32 %v589, %v734
        %v847 = vsub.f32 %v594, %v735
        %v848 = vsub.f32 %v599, %v736
        %v849 = vsub.f32 %v604, %v737
        %v850 = vmul.f32 %v834, %v818
        %v851 = vmul.f32 %v835, %v819
        %v852 = vmul.f32 %v836, %v820
        %v853 = vmul.f32 %v837, %v821
        %v854 = vmul.f32 %v838, %v822
        %v855 = vmul.f32 %v839, %v823
        %v856 = vmul.f32 %v840, %v824
        %v857 = vmul.f32 %v841, %v825
        %v858 = vmul.f32 %v842, %v826
        %v859 = vmul.f32 %v843, %v827
        %v860 = vmul.f32 %v844, %v828
        %v861 = vmul.f32 %v845, %v829
        %v862 = vmul.f32 %v846, %v830
        %v863 = vmul.f32 %v847, %v831
        %v864 = vmul.f32 %v848, %v832
        %v865 = vmul.f32 %v849, %v833
        %v867 = vlaneseq
        %v868 = vshrl.u32 %v867, 7
        %v869 = vsub.s32 0, %v868
        %v870 = vrot.slane %v607, %v869
        %v872 = vmul.f32 %v850, %v870
        %v873 = vmul.f32 %v851, %v870
        %v874 = vmul.f32 %v852, %v870
        %v875 = vmul.f32 %v853, %v870
        %v876 = vmul.f32 %v854, %v870
        %v877 = vmul.f32 %v855, %v870
        %v878 = vmul.f32 %v856, %v870
        %v879 = vmul.f32 %v857, %v870
        %v880 = vmul.f32 %v858, %v870
        %v881 = vmul.f32 %v859, %v870
        %v882 = vmul.f32 %v860, %v870
        %v883 = vmul.f32 %v861, %v870
        %v884 = vmul.f32 %v862, %v870
        %v885 = vmul.f32 %v863, %v870
        %v886 = vmul.f32 %v864, %v870
        %v887 = vmul.f32 %v865, %v870
        %v889 = vlaneseq
        %v890 = vshrl.u32 %v889, 7
        %v891 = vsub.s32 0, %v890
        %v892 = vrot.slane %v608, %v891
        %v894 = vadd.f32 %v872, %v892
        %v895 = vadd.f32 %v873, %v892
        %v896 = vadd.f32 %v874, %v892
        %v897 = vadd.f32 %v875, %v892
        %v898 = vadd.f32 %v876, %v892
        %v899 = vadd.f32 %v877, %v892
        %v900 = vadd.f32 %v878, %v892
        %v901 = vadd.f32 %v879, %v892
        %v902 = vadd.f32 %v880, %v892
        %v903 = vadd.f32 %v881, %v892
        %v904 = vadd.f32 %v882, %v892
        %v905 = vadd.f32 %v883, %v892
        %v906 = vadd.f32 %v884, %v892
        %v907 = vadd.f32 %v885, %v892
        %v908 = vadd.f32 %v886, %v892
        %v909 = vadd.f32 %v887, %v892
        %v910 = vmax.f32 %v894, 0.0
        %v911 = vmax.f32 %v895, 0.0
        %v912 = vmax.f32 %v896, 0.0
        %v913 = vmax.f32 %v897, 0.0
        %v914 = vmax.f32 %v898, 0.0
        %v915 = vmax.f32 %v899, 0.0
        %v916 = vmax.f32 %v900, 0.0
        %v917 = vmax.f32 %v901, 0.0
        %v918 = vmax.f32 %v902, 0.0
        %v919 = vmax.f32 %v903, 0.0
        %v920 = vmax.f32 %v904, 0.0
        %v921 = vmax.f32 %v905, 0.0
        %v922 = vmax.f32 %v906, 0.0
        %v923 = vmax.f32 %v907, 0.0
        %v924 = vmax.f32 %v908, 0.0
        %v925 = vmax.f32 %v909, 0.0
        %v926 = vld [vmem:[%s5] sm:$0xf]
        %v927 = vld [vmem:[%s5 + $0x4] sm:$0xf]
        %v928 = vld [vmem:[%s5 + $0x8] sm:$0xf]
        %v929 = vld [vmem:[%s5 + $0xc] sm:$0xf]
        %v930 = vunpack.c.l.bf16 %v926
        %v931 = vunpack.c.l.bf16 %v927
        %v932 = vunpack.c.l.bf16 %v928
        %v933 = vunpack.c.l.bf16 %v929
        %v934 = vld [vmem:[%s6] sm:$0x1]
        %v936 = vlaneseq
        %v937 = vshrl.u32 %v936, 7
        %v938 = vsub.s32 0, %v937
        %v939 = vrot.slane %v934, %v938
        %v942 = vsel %vm609, %v910, 0
        %v945 = vsel %vm609, %v911, 0
        %v948 = vsel %vm609, %v912, 0
        %v951 = vsel %vm609, %v913, 0
        %v954 = vsel %vm609, %v914, 0
        %v957 = vsel %vm609, %v915, 0
        %v960 = vsel %vm609, %v916, 0
        %v963 = vsel %vm609, %v917, 0
        %v966 = vsel %vm609, %v918, 0
        %v969 = vsel %vm609, %v919, 0
        %v972 = vsel %vm609, %v920, 0
        %v975 = vsel %vm609, %v921, 0
        %v978 = vsel %vm609, %v922, 0
        %v981 = vsel %vm609, %v923, 0
        %v984 = vsel %vm609, %v924, 0
        %v987 = vsel %vm609, %v925, 0
        %989 = vmatprep.subr.mxu0 0.0
        %990 = vmatpush1.msra.mxu0 %v930
        %991 = vmatprep.subr.mxu0 0.0
        %992 = vmatpush1.msra.mxu0 %v931
        %993 = vmatprep.subr.mxu0 0.0
        %994 = vmatpush1.msra.mxu0 %v932
        %995 = vmatprep.subr.mxu0 0.0
        %996 = vmatpush1.msra.mxu0 %v933
        %997 = vmatprep.subr.mxu0 0.0
        %998 = vmatpush1.msra.mxu0 0.0
        %999 = vmatprep.subr.mxu0 0.0
        %1000 = vmatpush1.msra.mxu0 0.0
        %1001 = vmatprep.subr.mxu0 0.0
        %1002 = vmatpush1.msra.mxu0 0.0
        %1003 = vmatprep.subr.mxu0 0.0
        %1004 = vmatpush1.msra.mxu0 0.0
        %1005 = vmatprep.subr.mxu0 0.0
        %1006 = vmatpush1.msra.mxu0 0.0
        %1007 = vmatprep.subr.mxu0 0.0
        %1008 = vmatpush1.msra.mxu0 0.0
        %1009 = vmatprep.subr.mxu0 0.0
        %1010 = vmatpush1.msra.mxu0 0.0
        %1011 = vmatprep.subr.mxu0 0.0
        %1012 = vmatpush1.msra.mxu0 0.0
        %1013 = vmatprep.subr.mxu0 0.0
        %1014 = vmatpush1.msra.mxu0 0.0
        %1015 = vmatprep.subr.mxu0 0.0
        %1016 = vmatpush1.msra.mxu0 0.0
        %1017 = vmatprep.subr.mxu0 0.0
        %1018 = vmatpush1.msra.mxu0 0.0
        %1019 = vmatprep.subr.mxu0 0.0
        %1020 = vmatpush1.msra.mxu0 0.0
        %1021 = vmatprep.subr.mxu0 0.0
        %1022 = vmatpush1.msra.mxu0 0.0
        %1023 = vmatprep.subr.mxu0 0.0
        %1024 = vmatpush1.msra.mxu0 0.0
        %1025 = vmatprep.subr.mxu0 0.0
        %1026 = vmatpush1.msra.mxu0 0.0
        %1027 = vmatprep.subr.mxu0 0.0
        %1028 = vmatpush1.msra.mxu0 0.0
        %1029 = vmatprep.subr.mxu0 0.0
        %1030 = vmatpush1.msra.mxu0 0.0
        %1031 = vmatprep.subr.mxu0 0.0
        %1032 = vmatpush1.msra.mxu0 0.0
        %1033 = vmatprep.subr.mxu0 0.0
        %1034 = vmatpush1.msra.mxu0 0.0
        %1035 = vmatprep.subr.mxu0 0.0
        %1036 = vmatpush1.msra.mxu0 0.0
        %1037 = vmatprep.subr.mxu0 0.0
        %1038 = vmatpush1.msra.mxu0 0.0
        %1039 = vmatprep.subr.mxu0 0.0
        %1040 = vmatpush1.msra.mxu0 0.0
        %1041 = vmatprep.subr.mxu0 0.0
        %1042 = vmatpush1.msra.mxu0 0.0
        %1043 = vmatprep.subr.mxu0 0.0
        %1044 = vmatpush1.msra.mxu0 0.0
        %1045 = vmatprep.subr.mxu0 0.0
        %1046 = vmatpush1.msra.mxu0 0.0
        %1047 = vmatprep.subr.mxu0 0.0
        %1048 = vmatpush1.msra.mxu0 0.0
        %1049 = vmatprep.subr.mxu0 0.0
        %1050 = vmatpush1.msra.mxu0 0.0
        %1051 = vmatprep.subr.mxu0 0.0
        %1052 = vmatpush1.msra.mxu0 0.0
        %1053 = vmatprep.mubr.f32.mxu0 0.0
        %1054 = vmatmul.mubr.f32.gmra.mrb[0].mxu0 %v942
        %v1055 = vpop.f32.mrb[0].mxu0
        %v1056 = vadd.f32 %v939, %v1055
        %v1057 = vpop.f32.mrb[0].mxu0
        %1058 = vmatprep.mubr.f32.mxu0 0.0
        %1059 = vmatmul.mubr.f32.gmra.mrb[0].mxu0 %v945
        %v1060 = vpop.f32.mrb[0].mxu0
        %v1061 = vadd.f32 %v939, %v1060
        %v1062 = vpop.f32.mrb[0].mxu0
        %1063 = vmatprep.mubr.f32.mxu0 0.0
        %1064 = vmatmul.mubr.f32.gmra.mrb[0].mxu0 %v948
        %v1065 = vpop.f32.mrb[0].mxu0
        %v1066 = vadd.f32 %v939, %v1065
        %v1067 = vpop.f32.mrb[0].mxu0
        %1068 = vmatprep.mubr.f32.mxu0 0.0
        %1069 = vmatmul.mubr.f32.gmra.mrb[0].mxu0 %v951
        %v1070 = vpop.f32.mrb[0].mxu0
        %v1071 = vadd.f32 %v939, %v1070
        %v1072 = vpop.f32.mrb[0].mxu0
        %1073 = vmatprep.mubr.f32.mxu0 0.0
        %1074 = vmatmul.mubr.f32.gmra.mrb[0].mxu0 %v954
        %v1075 = vpop.f32.mrb[0].mxu0
        %v1076 = vadd.f32 %v939, %v1075
        %v1077 = vpop.f32.mrb[0].mxu0
        %1078 = vmatprep.mubr.f32.mxu0 0.0
        %1079 = vmatmul.mubr.f32.gmra.mrb[0].mxu0 %v957
        %v1080 = vpop.f32.mrb[0].mxu0
        %v1081 = vadd.f32 %v939, %v1080
        %v1082 = vpop.f32.mrb[0].mxu0
        %1083 = vmatprep.mubr.f32.mxu0 0.0
        %1084 = vmatmul.mubr.f32.gmra.mrb[0].mxu0 %v960
        %v1085 = vpop.f32.mrb[0].mxu0
        %v1086 = vadd.f32 %v939, %v1085
        %v1087 = vpop.f32.mrb[0].mxu0
        %1088 = vmatprep.mubr.f32.mxu0 0.0
        %1089 = vmatmul.mubr.f32.gmra.mrb[0].mxu0 %v963
        %v1090 = vpop.f32.mrb[0].mxu0
        %v1091 = vadd.f32 %v939, %v1090
        %v1092 = vpop.f32.mrb[0].mxu0
        %1093 = vmatprep.mubr.f32.mxu0 0.0
        %1094 = vmatmul.mubr.f32.gmra.mrb[0].mxu0 %v966
        %v1095 = vpop.f32.mrb[0].mxu0
        %v1096 = vadd.f32 %v939, %v1095
        %v1097 = vpop.f32.mrb[0].mxu0
        %1098 = vmatprep.mubr.f32.mxu0 0.0
        %1099 = vmatmul.mubr.f32.gmra.mrb[0].mxu0 %v969
        %v1100 = vpop.f32.mrb[0].mxu0
        %v1101 = vadd.f32 %v939, %v1100
        %v1102 = vpop.f32.mrb[0].mxu0
        %1103 = vmatprep.mubr.f32.mxu0 0.0
        %1104 = vmatmul.mubr.f32.gmra.mrb[0].mxu0 %v972
        %v1105 = vpop.f32.mrb[0].mxu0
        %v1106 = vadd.f32 %v939, %v1105
        %v1107 = vpop.f32.mrb[0].mxu0
        %1108 = vmatprep.mubr.f32.mxu0 0.0
        %1109 = vmatmul.mubr.f32.gmra.mrb[0].mxu0 %v975
        %v1110 = vpop.f32.mrb[0].mxu0
        %v1111 = vadd.f32 %v939, %v1110
        %v1112 = vpop.f32.mrb[0].mxu0
        %1113 = vmatprep.mubr.f32.mxu0 0.0
        %1114 = vmatmul.mubr.f32.gmra.mrb[0].mxu0 %v978
        %v1115 = vpop.f32.mrb[0].mxu0
        %v1116 = vadd.f32 %v939, %v1115
        %v1117 = vpop.f32.mrb[0].mxu0
        %1118 = vmatprep.mubr.f32.mxu0 0.0
        %1119 = vmatmul.mubr.f32.gmra.mrb[0].mxu0 %v981
        %v1120 = vpop.f32.mrb[0].mxu0
        %v1121 = vadd.f32 %v939, %v1120
        %v1122 = vpop.f32.mrb[0].mxu0
        %1123 = vmatprep.mubr.f32.mxu0 0.0
        %1124 = vmatmul.mubr.f32.gmra.mrb[0].mxu0 %v984
        %v1125 = vpop.f32.mrb[0].mxu0
        %v1126 = vadd.f32 %v939, %v1125
        %v1127 = vpop.f32.mrb[0].mxu0
        %1128 = vmatprep.mubr.f32.mxu0 0.0
        %1129 = vmatmul.mubr.f32.gmra.mrb[0].mxu0 %v987
        %v1130 = vpop.f32.mrb[0].mxu0
        %v1131 = vadd.f32 %v939, %v1130
        %v1132 = vpop.f32.mrb[0].mxu0
        %1133 = vdwg.mxu0
        %v1134 = vld [vmem:[%s7] sm:$0x1]
        %v1135 = vld [vmem:[%s8] sm:$0x1]
        %v1136 = vsel %vm609, %v1056, 0.0
        %1137 = vadd.xlane.f32.xlu0 %v1136
        %v1138 = vpop.xlane.xlu0 %1137
        %v1139 = vsel %vm609, %v1061, 0.0
        %1140 = vadd.xlane.f32.xlu0 %v1139
        %v1141 = vpop.xlane.xlu0 %1140
        %v1142 = vsel %vm609, %v1066, 0.0
        %1143 = vadd.xlane.f32.xlu0 %v1142
        %v1144 = vpop.xlane.xlu0 %1143
        %v1145 = vsel %vm609, %v1071, 0.0
        %1146 = vadd.xlane.f32.xlu0 %v1145
        %v1147 = vpop.xlane.xlu0 %1146
        %v1148 = vsel %vm609, %v1076, 0.0
        %1149 = vadd.xlane.f32.xlu0 %v1148
        %v1150 = vpop.xlane.xlu0 %1149
        %v1151 = vsel %vm609, %v1081, 0.0
        %1152 = vadd.xlane.f32.xlu0 %v1151
        %v1153 = vpop.xlane.xlu0 %1152
        %v1154 = vsel %vm609, %v1086, 0.0
        %1155 = vadd.xlane.f32.xlu0 %v1154
        %v1156 = vpop.xlane.xlu0 %1155
        %v1157 = vsel %vm609, %v1091, 0.0
        %1158 = vadd.xlane.f32.xlu0 %v1157
        %v1159 = vpop.xlane.xlu0 %1158
        %v1160 = vsel %vm609, %v1096, 0.0
        %1161 = vadd.xlane.f32.xlu0 %v1160
        %v1162 = vpop.xlane.xlu0 %1161
        %v1163 = vsel %vm609, %v1101, 0.0
        %1164 = vadd.xlane.f32.xlu0 %v1163
        %v1165 = vpop.xlane.xlu0 %1164
        %v1166 = vsel %vm609, %v1106, 0.0
        %1167 = vadd.xlane.f32.xlu0 %v1166
        %v1168 = vpop.xlane.xlu0 %1167
        %v1169 = vsel %vm609, %v1111, 0.0
        %1170 = vadd.xlane.f32.xlu0 %v1169
        %v1171 = vpop.xlane.xlu0 %1170
        %v1172 = vsel %vm609, %v1116, 0.0
        %1173 = vadd.xlane.f32.xlu0 %v1172
        %v1174 = vpop.xlane.xlu0 %1173
        %v1175 = vsel %vm609, %v1121, 0.0
        %1176 = vadd.xlane.f32.xlu0 %v1175
        %v1177 = vpop.xlane.xlu0 %1176
        %v1178 = vsel %vm609, %v1126, 0.0
        %1179 = vadd.xlane.f32.xlu0 %v1178
        %v1180 = vpop.xlane.xlu0 %1179
        %v1181 = vsel %vm609, %v1131, 0.0
        %1182 = vadd.xlane.f32.xlu0 %v1181
        %v1183 = vpop.xlane.xlu0 %1182
        %v1184 = vmul.f32 %v1056, %v1056
        %v1185 = vmul.f32 %v1061, %v1061
        %v1186 = vmul.f32 %v1066, %v1066
        %v1187 = vmul.f32 %v1071, %v1071
        %v1188 = vmul.f32 %v1076, %v1076
        %v1189 = vmul.f32 %v1081, %v1081
        %v1190 = vmul.f32 %v1086, %v1086
        %v1191 = vmul.f32 %v1091, %v1091
        %v1192 = vmul.f32 %v1096, %v1096
        %v1193 = vmul.f32 %v1101, %v1101
        %v1194 = vmul.f32 %v1106, %v1106
        %v1195 = vmul.f32 %v1111, %v1111
        %v1196 = vmul.f32 %v1116, %v1116
        %v1197 = vmul.f32 %v1121, %v1121
        %v1198 = vmul.f32 %v1126, %v1126
        %v1199 = vmul.f32 %v1131, %v1131
        %v1200 = vsel %vm609, %v1184, 0.0
        %1201 = vadd.xlane.f32.xlu0 %v1200
        %v1202 = vpop.xlane.xlu0 %1201
        %v1203 = vsel %vm609, %v1185, 0.0
        %1204 = vadd.xlane.f32.xlu0 %v1203
        %v1205 = vpop.xlane.xlu0 %1204
        %v1206 = vsel %vm609, %v1186, 0.0
        %1207 = vadd.xlane.f32.xlu0 %v1206
        %v1208 = vpop.xlane.xlu0 %1207
        %v1209 = vsel %vm609, %v1187, 0.0
        %1210 = vadd.xlane.f32.xlu0 %v1209
        %v1211 = vpop.xlane.xlu0 %1210
        %v1212 = vsel %vm609, %v1188, 0.0
        %1213 = vadd.xlane.f32.xlu0 %v1212
        %v1214 = vpop.xlane.xlu0 %1213
        %v1215 = vsel %vm609, %v1189, 0.0
        %1216 = vadd.xlane.f32.xlu0 %v1215
        %v1217 = vpop.xlane.xlu0 %1216
        %v1218 = vsel %vm609, %v1190, 0.0
        %1219 = vadd.xlane.f32.xlu0 %v1218
        %v1220 = vpop.xlane.xlu0 %1219
        %v1221 = vsel %vm609, %v1191, 0.0
        %1222 = vadd.xlane.f32.xlu0 %v1221
        %v1223 = vpop.xlane.xlu0 %1222
        %v1224 = vsel %vm609, %v1192, 0.0
        %1225 = vadd.xlane.f32.xlu0 %v1224
        %v1226 = vpop.xlane.xlu0 %1225
        %v1227 = vsel %vm609, %v1193, 0.0
        %1228 = vadd.xlane.f32.xlu0 %v1227
        %v1229 = vpop.xlane.xlu0 %1228
        %v1230 = vsel %vm609, %v1194, 0.0
        %1231 = vadd.xlane.f32.xlu0 %v1230
        %v1232 = vpop.xlane.xlu0 %1231
        %v1233 = vsel %vm609, %v1195, 0.0
        %1234 = vadd.xlane.f32.xlu0 %v1233
        %v1235 = vpop.xlane.xlu0 %1234
        %v1236 = vsel %vm609, %v1196, 0.0
        %1237 = vadd.xlane.f32.xlu0 %v1236
        %v1238 = vpop.xlane.xlu0 %1237
        %v1239 = vsel %vm609, %v1197, 0.0
        %1240 = vadd.xlane.f32.xlu0 %v1239
        %v1241 = vpop.xlane.xlu0 %1240
        %v1242 = vsel %vm609, %v1198, 0.0
        %1243 = vadd.xlane.f32.xlu0 %v1242
        %v1244 = vpop.xlane.xlu0 %1243
        %v1245 = vsel %vm609, %v1199, 0.0
        %1246 = vadd.xlane.f32.xlu0 %v1245
        %v1247 = vpop.xlane.xlu0 %1246
        %v1248 = vmul.f32 %v1138, 0.03125
        %v1249 = vmul.f32 %v1141, 0.03125
        %v1250 = vmul.f32 %v1144, 0.03125
        %v1251 = vmul.f32 %v1147, 0.03125
        %v1252 = vmul.f32 %v1150, 0.03125
        %v1253 = vmul.f32 %v1153, 0.03125
        %v1254 = vmul.f32 %v1156, 0.03125
        %v1255 = vmul.f32 %v1159, 0.03125
        %v1256 = vmul.f32 %v1162, 0.03125
        %v1257 = vmul.f32 %v1165, 0.03125
        %v1258 = vmul.f32 %v1168, 0.03125
        %v1259 = vmul.f32 %v1171, 0.03125
        %v1260 = vmul.f32 %v1174, 0.03125
        %v1261 = vmul.f32 %v1177, 0.03125
        %v1262 = vmul.f32 %v1180, 0.03125
        %v1263 = vmul.f32 %v1183, 0.03125
        %v1264 = vmul.f32 %v1202, 0.03125
        %v1265 = vmul.f32 %v1205, 0.03125
        %v1266 = vmul.f32 %v1208, 0.03125
        %v1267 = vmul.f32 %v1211, 0.03125
        %v1268 = vmul.f32 %v1214, 0.03125
        %v1269 = vmul.f32 %v1217, 0.03125
        %v1270 = vmul.f32 %v1220, 0.03125
        %v1271 = vmul.f32 %v1223, 0.03125
        %v1272 = vmul.f32 %v1226, 0.03125
        %v1273 = vmul.f32 %v1229, 0.03125
        %v1274 = vmul.f32 %v1232, 0.03125
        %v1275 = vmul.f32 %v1235, 0.03125
        %v1276 = vmul.f32 %v1238, 0.03125
        %v1277 = vmul.f32 %v1241, 0.03125
        %v1278 = vmul.f32 %v1244, 0.03125
        %v1279 = vmul.f32 %v1247, 0.03125
        %v1280 = vmul.f32 %v1248, %v1248
        %v1281 = vmul.f32 %v1249, %v1249
        %v1282 = vmul.f32 %v1250, %v1250
        %v1283 = vmul.f32 %v1251, %v1251
        %v1284 = vmul.f32 %v1252, %v1252
        %v1285 = vmul.f32 %v1253, %v1253
        %v1286 = vmul.f32 %v1254, %v1254
        %v1287 = vmul.f32 %v1255, %v1255
        %v1288 = vmul.f32 %v1256, %v1256
        %v1289 = vmul.f32 %v1257, %v1257
        %v1290 = vmul.f32 %v1258, %v1258
        %v1291 = vmul.f32 %v1259, %v1259
        %v1292 = vmul.f32 %v1260, %v1260
        %v1293 = vmul.f32 %v1261, %v1261
        %v1294 = vmul.f32 %v1262, %v1262
        %v1295 = vmul.f32 %v1263, %v1263
        %v1296 = vsub.f32 %v1264, %v1280
        %v1297 = vsub.f32 %v1265, %v1281
        %v1298 = vsub.f32 %v1266, %v1282
        %v1299 = vsub.f32 %v1267, %v1283
        %v1300 = vsub.f32 %v1268, %v1284
        %v1301 = vsub.f32 %v1269, %v1285
        %v1302 = vsub.f32 %v1270, %v1286
        %v1303 = vsub.f32 %v1271, %v1287
        %v1304 = vsub.f32 %v1272, %v1288
        %v1305 = vsub.f32 %v1273, %v1289
        %v1306 = vsub.f32 %v1274, %v1290
        %v1307 = vsub.f32 %v1275, %v1291
        %v1308 = vsub.f32 %v1276, %v1292
        %v1309 = vsub.f32 %v1277, %v1293
        %v1310 = vsub.f32 %v1278, %v1294
        %v1311 = vsub.f32 %v1279, %v1295
        %v1312 = vmax.f32 %v1296, 0.0
        %v1313 = vmax.f32 %v1297, 0.0
        %v1314 = vmax.f32 %v1298, 0.0
        %v1315 = vmax.f32 %v1299, 0.0
        %v1316 = vmax.f32 %v1300, 0.0
        %v1317 = vmax.f32 %v1301, 0.0
        %v1318 = vmax.f32 %v1302, 0.0
        %v1319 = vmax.f32 %v1303, 0.0
        %v1320 = vmax.f32 %v1304, 0.0
        %v1321 = vmax.f32 %v1305, 0.0
        %v1322 = vmax.f32 %v1306, 0.0
        %v1323 = vmax.f32 %v1307, 0.0
        %v1324 = vmax.f32 %v1308, 0.0
        %v1325 = vmax.f32 %v1309, 0.0
        %v1326 = vmax.f32 %v1310, 0.0
        %v1327 = vmax.f32 %v1311, 0.0
        %v1328 = vadd.f32 %v1312, 1e-05
        %v1329 = vadd.f32 %v1313, 1e-05
        %v1330 = vadd.f32 %v1314, 1e-05
        %v1331 = vadd.f32 %v1315, 1e-05
        %v1332 = vadd.f32 %v1316, 1e-05
        %v1333 = vadd.f32 %v1317, 1e-05
        %v1334 = vadd.f32 %v1318, 1e-05
        %v1335 = vadd.f32 %v1319, 1e-05
        %v1336 = vadd.f32 %v1320, 1e-05
        %v1337 = vadd.f32 %v1321, 1e-05
        %v1338 = vadd.f32 %v1322, 1e-05
        %v1339 = vadd.f32 %v1323, 1e-05
        %v1340 = vadd.f32 %v1324, 1e-05
        %v1341 = vadd.f32 %v1325, 1e-05
        %v1342 = vadd.f32 %v1326, 1e-05
        %v1343 = vadd.f32 %v1327, 1e-05
        %v1344 = vrsqrt.pop %v1328
        %v1345 = vrsqrt.pop %v1329
        %v1346 = vrsqrt.pop %v1330
        %v1347 = vrsqrt.pop %v1331
        %v1348 = vrsqrt.pop %v1332
        %v1349 = vrsqrt.pop %v1333
        %v1350 = vrsqrt.pop %v1334
        %v1351 = vrsqrt.pop %v1335
        %v1352 = vrsqrt.pop %v1336
        %v1353 = vrsqrt.pop %v1337
        %v1354 = vrsqrt.pop %v1338
        %v1355 = vrsqrt.pop %v1339
        %v1356 = vrsqrt.pop %v1340
        %v1357 = vrsqrt.pop %v1341
        %v1358 = vrsqrt.pop %v1342
        %v1359 = vrsqrt.pop %v1343
        %v1360 = vsub.f32 %v1056, %v1248
        %v1361 = vsub.f32 %v1061, %v1249
        %v1362 = vsub.f32 %v1066, %v1250
        %v1363 = vsub.f32 %v1071, %v1251
        %v1364 = vsub.f32 %v1076, %v1252
        %v1365 = vsub.f32 %v1081, %v1253
        %v1366 = vsub.f32 %v1086, %v1254
        %v1367 = vsub.f32 %v1091, %v1255
        %v1368 = vsub.f32 %v1096, %v1256
        %v1369 = vsub.f32 %v1101, %v1257
        %v1370 = vsub.f32 %v1106, %v1258
        %v1371 = vsub.f32 %v1111, %v1259
        %v1372 = vsub.f32 %v1116, %v1260
        %v1373 = vsub.f32 %v1121, %v1261
        %v1374 = vsub.f32 %v1126, %v1262
        %v1375 = vsub.f32 %v1131, %v1263
        %v1376 = vmul.f32 %v1360, %v1344
        %v1377 = vmul.f32 %v1361, %v1345
        %v1378 = vmul.f32 %v1362, %v1346
        %v1379 = vmul.f32 %v1363, %v1347
        %v1380 = vmul.f32 %v1364, %v1348
        %v1381 = vmul.f32 %v1365, %v1349
        %v1382 = vmul.f32 %v1366, %v1350
        %v1383 = vmul.f32 %v1367, %v1351
        %v1384 = vmul.f32 %v1368, %v1352
        %v1385 = vmul.f32 %v1369, %v1353
        %v1386 = vmul.f32 %v1370, %v1354
        %v1387 = vmul.f32 %v1371, %v1355
        %v1388 = vmul.f32 %v1372, %v1356
        %v1389 = vmul.f32 %v1373, %v1357
        %v1390 = vmul.f32 %v1374, %v1358
        %v1391 = vmul.f32 %v1375, %v1359
        %v1393 = vlaneseq
        %v1394 = vshrl.u32 %v1393, 7
        %v1395 = vsub.s32 0, %v1394
        %v1396 = vrot.slane %v1134, %v1395
        %v1398 = vmul.f32 %v1376, %v1396
        %v1399 = vmul.f32 %v1377, %v1396
        %v1400 = vmul.f32 %v1378, %v1396
        %v1401 = vmul.f32 %v1379, %v1396
        %v1402 = vmul.f32 %v1380, %v1396
        %v1403 = vmul.f32 %v1381, %v1396
        %v1404 = vmul.f32 %v1382, %v1396
        %v1405 = vmul.f32 %v1383, %v1396
        %v1406 = vmul.f32 %v1384, %v1396
        %v1407 = vmul.f32 %v1385, %v1396
        %v1408 = vmul.f32 %v1386, %v1396
        %v1409 = vmul.f32 %v1387, %v1396
        %v1410 = vmul.f32 %v1388, %v1396
        %v1411 = vmul.f32 %v1389, %v1396
        %v1412 = vmul.f32 %v1390, %v1396
        %v1413 = vmul.f32 %v1391, %v1396
        %v1415 = vlaneseq
        %v1416 = vshrl.u32 %v1415, 7
        %v1417 = vsub.s32 0, %v1416
        %v1418 = vrot.slane %v1135, %v1417
        %v1420 = vadd.f32 %v1398, %v1418
        %v1421 = vadd.f32 %v1399, %v1418
        %v1422 = vadd.f32 %v1400, %v1418
        %v1423 = vadd.f32 %v1401, %v1418
        %v1424 = vadd.f32 %v1402, %v1418
        %v1425 = vadd.f32 %v1403, %v1418
        %v1426 = vadd.f32 %v1404, %v1418
        %v1427 = vadd.f32 %v1405, %v1418
        %v1428 = vadd.f32 %v1406, %v1418
        %v1429 = vadd.f32 %v1407, %v1418
        %v1430 = vadd.f32 %v1408, %v1418
        %v1431 = vadd.f32 %v1409, %v1418
        %v1432 = vadd.f32 %v1410, %v1418
        %v1433 = vadd.f32 %v1411, %v1418
        %v1434 = vadd.f32 %v1412, %v1418
        %v1435 = vadd.f32 %v1413, %v1418
        %v1436 = vmax.f32 %v1420, 0.0
        %v1437 = vmax.f32 %v1421, 0.0
        %v1438 = vmax.f32 %v1422, 0.0
        %v1439 = vmax.f32 %v1423, 0.0
        %v1440 = vmax.f32 %v1424, 0.0
        %v1441 = vmax.f32 %v1425, 0.0
        %v1442 = vmax.f32 %v1426, 0.0
        %v1443 = vmax.f32 %v1427, 0.0
        %v1444 = vmax.f32 %v1428, 0.0
        %v1445 = vmax.f32 %v1429, 0.0
        %v1446 = vmax.f32 %v1430, 0.0
        %v1447 = vmax.f32 %v1431, 0.0
        %v1448 = vmax.f32 %v1432, 0.0
        %v1449 = vmax.f32 %v1433, 0.0
        %v1450 = vmax.f32 %v1434, 0.0
        %v1451 = vmax.f32 %v1435, 0.0
        %v1452 = vld [vmem:[%s9] sm:$0xf]
        %v1453 = vld [vmem:[%s9 + $0x4] sm:$0xf]
        %v1454 = vld [vmem:[%s9 + $0x8] sm:$0xf]
        %v1455 = vld [vmem:[%s9 + $0xc] sm:$0xf]
        %v1456 = vunpack.c.l.bf16 %v1452
        %v1457 = vunpack.c.l.bf16 %v1453
        %v1458 = vunpack.c.l.bf16 %v1454
        %v1459 = vunpack.c.l.bf16 %v1455
        %v1460 = vld [vmem:[%s10] sm:$0x1]
        %v1462 = vlaneseq
        %v1463 = vshrl.u32 %v1462, 7
        %v1464 = vsub.s32 0, %v1463
        %v1465 = vrot.slane %v1460, %v1464
        %v1468 = vsel %vm609, %v1436, 0
        %v1471 = vsel %vm609, %v1437, 0
        %v1474 = vsel %vm609, %v1438, 0
        %v1477 = vsel %vm609, %v1439, 0
        %v1480 = vsel %vm609, %v1440, 0
        %v1483 = vsel %vm609, %v1441, 0
        %v1486 = vsel %vm609, %v1442, 0
        %v1489 = vsel %vm609, %v1443, 0
        %v1492 = vsel %vm609, %v1444, 0
        %v1495 = vsel %vm609, %v1445, 0
        %v1498 = vsel %vm609, %v1446, 0
        %v1501 = vsel %vm609, %v1447, 0
        %v1504 = vsel %vm609, %v1448, 0
        %v1507 = vsel %vm609, %v1449, 0
        %v1510 = vsel %vm609, %v1450, 0
        %v1513 = vsel %vm609, %v1451, 0
        %1515 = vmatprep.subr.mxu0 0.0
        %1516 = vmatpush1.msra.mxu0 %v1456
        %1517 = vmatprep.subr.mxu0 0.0
        %1518 = vmatpush1.msra.mxu0 %v1457
        %1519 = vmatprep.subr.mxu0 0.0
        %1520 = vmatpush1.msra.mxu0 %v1458
        %1521 = vmatprep.subr.mxu0 0.0
        %1522 = vmatpush1.msra.mxu0 %v1459
        %1523 = vmatprep.subr.mxu0 0.0
        %1524 = vmatpush1.msra.mxu0 0.0
        %1525 = vmatprep.subr.mxu0 0.0
        %1526 = vmatpush1.msra.mxu0 0.0
        %1527 = vmatprep.subr.mxu0 0.0
        %1528 = vmatpush1.msra.mxu0 0.0
        %1529 = vmatprep.subr.mxu0 0.0
        %1530 = vmatpush1.msra.mxu0 0.0
        %1531 = vmatprep.subr.mxu0 0.0
        %1532 = vmatpush1.msra.mxu0 0.0
        %1533 = vmatprep.subr.mxu0 0.0
        %1534 = vmatpush1.msra.mxu0 0.0
        %1535 = vmatprep.subr.mxu0 0.0
        %1536 = vmatpush1.msra.mxu0 0.0
        %1537 = vmatprep.subr.mxu0 0.0
        %1538 = vmatpush1.msra.mxu0 0.0
        %1539 = vmatprep.subr.mxu0 0.0
        %1540 = vmatpush1.msra.mxu0 0.0
        %1541 = vmatprep.subr.mxu0 0.0
        %1542 = vmatpush1.msra.mxu0 0.0
        %1543 = vmatprep.subr.mxu0 0.0
        %1544 = vmatpush1.msra.mxu0 0.0
        %1545 = vmatprep.subr.mxu0 0.0
        %1546 = vmatpush1.msra.mxu0 0.0
        %1547 = vmatprep.subr.mxu0 0.0
        %1548 = vmatpush1.msra.mxu0 0.0
        %1549 = vmatprep.subr.mxu0 0.0
        %1550 = vmatpush1.msra.mxu0 0.0
        %1551 = vmatprep.subr.mxu0 0.0
        %1552 = vmatpush1.msra.mxu0 0.0
        %1553 = vmatprep.subr.mxu0 0.0
        %1554 = vmatpush1.msra.mxu0 0.0
        %1555 = vmatprep.subr.mxu0 0.0
        %1556 = vmatpush1.msra.mxu0 0.0
        %1557 = vmatprep.subr.mxu0 0.0
        %1558 = vmatpush1.msra.mxu0 0.0
        %1559 = vmatprep.subr.mxu0 0.0
        %1560 = vmatpush1.msra.mxu0 0.0
        %1561 = vmatprep.subr.mxu0 0.0
        %1562 = vmatpush1.msra.mxu0 0.0
        %1563 = vmatprep.subr.mxu0 0.0
        %1564 = vmatpush1.msra.mxu0 0.0
        %1565 = vmatprep.subr.mxu0 0.0
        %1566 = vmatpush1.msra.mxu0 0.0
        %1567 = vmatprep.subr.mxu0 0.0
        %1568 = vmatpush1.msra.mxu0 0.0
        %1569 = vmatprep.subr.mxu0 0.0
        %1570 = vmatpush1.msra.mxu0 0.0
        %1571 = vmatprep.subr.mxu0 0.0
        %1572 = vmatpush1.msra.mxu0 0.0
        %1573 = vmatprep.subr.mxu0 0.0
        %1574 = vmatpush1.msra.mxu0 0.0
        %1575 = vmatprep.subr.mxu0 0.0
        %1576 = vmatpush1.msra.mxu0 0.0
        %1577 = vmatprep.subr.mxu0 0.0
        %1578 = vmatpush1.msra.mxu0 0.0
        %1579 = vmatprep.mubr.f32.mxu0 0.0
        %1580 = vmatmul.mubr.f32.gmra.mrb[0].mxu0 %v1468
        %v1581 = vpop.f32.mrb[0].mxu0
        %v1582 = vadd.f32 %v1465, %v1581
        %v1583 = vpop.f32.mrb[0].mxu0
        %1584 = vmatprep.mubr.f32.mxu0 0.0
        %1585 = vmatmul.mubr.f32.gmra.mrb[0].mxu0 %v1471
        %v1586 = vpop.f32.mrb[0].mxu0
        %v1587 = vadd.f32 %v1465, %v1586
        %v1588 = vpop.f32.mrb[0].mxu0
        %1589 = vmatprep.mubr.f32.mxu0 0.0
        %1590 = vmatmul.mubr.f32.gmra.mrb[0].mxu0 %v1474
        %v1591 = vpop.f32.mrb[0].mxu0
        %v1592 = vadd.f32 %v1465, %v1591
        %v1593 = vpop.f32.mrb[0].mxu0
        %1594 = vmatprep.mubr.f32.mxu0 0.0
        %1595 = vmatmul.mubr.f32.gmra.mrb[0].mxu0 %v1477
        %v1596 = vpop.f32.mrb[0].mxu0
        %v1597 = vadd.f32 %v1465, %v1596
        %v1598 = vpop.f32.mrb[0].mxu0
        %1599 = vmatprep.mubr.f32.mxu0 0.0
        %1600 = vmatmul.mubr.f32.gmra.mrb[0].mxu0 %v1480
        %v1601 = vpop.f32.mrb[0].mxu0
        %v1602 = vadd.f32 %v1465, %v1601
        %v1603 = vpop.f32.mrb[0].mxu0
        %1604 = vmatprep.mubr.f32.mxu0 0.0
        %1605 = vmatmul.mubr.f32.gmra.mrb[0].mxu0 %v1483
        %v1606 = vpop.f32.mrb[0].mxu0
        %v1607 = vadd.f32 %v1465, %v1606
        %v1608 = vpop.f32.mrb[0].mxu0
        %1609 = vmatprep.mubr.f32.mxu0 0.0
        %1610 = vmatmul.mubr.f32.gmra.mrb[0].mxu0 %v1486
        %v1611 = vpop.f32.mrb[0].mxu0
        %v1612 = vadd.f32 %v1465, %v1611
        %v1613 = vpop.f32.mrb[0].mxu0
        %1614 = vmatprep.mubr.f32.mxu0 0.0
        %1615 = vmatmul.mubr.f32.gmra.mrb[0].mxu0 %v1489
        %v1616 = vpop.f32.mrb[0].mxu0
        %v1617 = vadd.f32 %v1465, %v1616
        %v1618 = vpop.f32.mrb[0].mxu0
        %1619 = vmatprep.mubr.f32.mxu0 0.0
        %1620 = vmatmul.mubr.f32.gmra.mrb[0].mxu0 %v1492
        %v1621 = vpop.f32.mrb[0].mxu0
        %v1622 = vadd.f32 %v1465, %v1621
        %v1623 = vpop.f32.mrb[0].mxu0
        %1624 = vmatprep.mubr.f32.mxu0 0.0
        %1625 = vmatmul.mubr.f32.gmra.mrb[0].mxu0 %v1495
        %v1626 = vpop.f32.mrb[0].mxu0
        %v1627 = vadd.f32 %v1465, %v1626
        %v1628 = vpop.f32.mrb[0].mxu0
        %1629 = vmatprep.mubr.f32.mxu0 0.0
        %1630 = vmatmul.mubr.f32.gmra.mrb[0].mxu0 %v1498
        %v1631 = vpop.f32.mrb[0].mxu0
        %v1632 = vadd.f32 %v1465, %v1631
        %v1633 = vpop.f32.mrb[0].mxu0
        %1634 = vmatprep.mubr.f32.mxu0 0.0
        %1635 = vmatmul.mubr.f32.gmra.mrb[0].mxu0 %v1501
        %v1636 = vpop.f32.mrb[0].mxu0
        %v1637 = vadd.f32 %v1465, %v1636
        %v1638 = vpop.f32.mrb[0].mxu0
        %1639 = vmatprep.mubr.f32.mxu0 0.0
        %1640 = vmatmul.mubr.f32.gmra.mrb[0].mxu0 %v1504
        %v1641 = vpop.f32.mrb[0].mxu0
        %v1642 = vadd.f32 %v1465, %v1641
        %v1643 = vpop.f32.mrb[0].mxu0
        %1644 = vmatprep.mubr.f32.mxu0 0.0
        %1645 = vmatmul.mubr.f32.gmra.mrb[0].mxu0 %v1507
        %v1646 = vpop.f32.mrb[0].mxu0
        %v1647 = vadd.f32 %v1465, %v1646
        %v1648 = vpop.f32.mrb[0].mxu0
        %1649 = vmatprep.mubr.f32.mxu0 0.0
        %1650 = vmatmul.mubr.f32.gmra.mrb[0].mxu0 %v1510
        %v1651 = vpop.f32.mrb[0].mxu0
        %v1652 = vadd.f32 %v1465, %v1651
        %v1653 = vpop.f32.mrb[0].mxu0
        %1654 = vmatprep.mubr.f32.mxu0 0.0
        %1655 = vmatmul.mubr.f32.gmra.mrb[0].mxu0 %v1513
        %v1656 = vpop.f32.mrb[0].mxu0
        %v1657 = vadd.f32 %v1465, %v1656
        %v1658 = vpop.f32.mrb[0].mxu0
        %1659 = vdwg.mxu0
        %v1660 = vtanh.pop %v1582
        %v1661 = vtanh.pop %v1587
        %v1662 = vtanh.pop %v1592
        %v1663 = vtanh.pop %v1597
        %v1664 = vtanh.pop %v1602
        %v1665 = vtanh.pop %v1607
        %v1666 = vtanh.pop %v1612
        %v1667 = vtanh.pop %v1617
        %v1668 = vtanh.pop %v1622
        %v1669 = vtanh.pop %v1627
        %v1670 = vtanh.pop %v1632
        %v1671 = vtanh.pop %v1637
        %v1672 = vtanh.pop %v1642
        %v1673 = vtanh.pop %v1647
        %v1674 = vtanh.pop %v1652
        %v1675 = vtanh.pop %v1657
        %1676 = vst [vmem:[%s380] sm:$0xff] %v1660
        %1677 = vst [vmem:[%s380 + $0x8] sm:$0xff] %v1661
        %1678 = vst [vmem:[%s380 + $0x10] sm:$0xff] %v1662
        %1679 = vst [vmem:[%s380 + $0x18] sm:$0xff] %v1663
        %1680 = vst [vmem:[%s380 + $0x20] sm:$0xff] %v1664
        %1681 = vst [vmem:[%s380 + $0x28] sm:$0xff] %v1665
        %1682 = vst [vmem:[%s380 + $0x30] sm:$0xff] %v1666
        %1683 = vst [vmem:[%s380 + $0x38] sm:$0xff] %v1667
        %1684 = vst [vmem:[%s380 + $0x40] sm:$0xff] %v1668
        %1685 = vst [vmem:[%s380 + $0x48] sm:$0xff] %v1669
        %1686 = vst [vmem:[%s380 + $0x50] sm:$0xff] %v1670
        %1687 = vst [vmem:[%s380 + $0x58] sm:$0xff] %v1671
        %1688 = vst [vmem:[%s380 + $0x60] sm:$0xff] %v1672
        %1689 = vst [vmem:[%s380 + $0x68] sm:$0xff] %v1673
        %1690 = vst [vmem:[%s380 + $0x70] sm:$0xff] %v1674
        %1691 = vst [vmem:[%s380 + $0x78] sm:$0xff] %v1675
        %s1692 = sand.u32 %s269, 1
        %s1693 = scalar_lea.sflag [#allocation3], %s1692
        %s1694 = sand.u32 %s269, 1
        %s1695 = smul.addr %s1694, 128
        %s1696 = scalar_lea.vmem [#allocation2], %s1695
        // Predicated region
        $region65: #{tpu_custom_call.1} parent=63 // pred_check
          %p1697 = pneg %p279
        $region66: #{tpu_custom_call.1} parent=63 // pred_check_branch
          %1699 = sbr.rel (%p1697) target = $region68
        $region67: #{tpu_custom_call.1} parent=63 // pred_region
          %s1700 = smul.u32 16, %s25
          %s1702 = ssub.s32 2048, 2048
          %1703 = vsyncadd %s1693, %s1702
          %s1704 = smul.addr %s1700, 128
          %s1705 = scalar_lea.hbm %s11, %s1704
          %s1706 = sshll.u32 %s1696, 4
          %s1707 = int_to_ptr.vmem [resolvable:$true] %s1706
          %1712 = dma.vmem_to_hbm [thread:$0]  %s1707, 2048, %s1705, %s1693, 128, 128, 8
        $region68: #{tpu_custom_call.1} parent=63 // pred_fallthru
          _
      $region64: #{tpu_custom_call.1} parent=5 // pred_fallthru
        _
      %p1713 = scmp.le.s32.totalorder 2, %s20
      // Predicated region
      $region69: #{tpu_custom_call.1} parent=5 // pred_check
        %p1714 = pneg %p1713
      $region70: #{tpu_custom_call.1} parent=5 // pred_check_branch
        %1716 = sbr.rel (%p1714) target = $region72
      $region71: #{tpu_custom_call.1} parent=5 // pred_region
        %s1717 = ssub.s32 %s20, 2
        // Predicated region
        $region73: #{tpu_custom_call.1} parent=71 // pred_check
          %p1718 = pneg %p285
        $region74: #{tpu_custom_call.1} parent=71 // pred_check_branch
          %1720 = sbr.rel (%p1718) target = $region76
        $region75: #{tpu_custom_call.1} parent=71 // pred_region
          %s1721 = sand.u32 %s270, 1
          %s1722 = scalar_lea.sflag [#allocation3], %s1721
          %s1723 = sand.u32 %s270, 1
          %s1724 = smul.addr %s1723, 128
          %s1725 = scalar_lea.vmem [#allocation2], %s1724
          %1726 = dma.done %s1722, 2048
        $region76: #{tpu_custom_call.1} parent=71 // pred_fallthru
          _
      $region72: #{tpu_custom_call.1} parent=5 // pred_fallthru
        _
    $region6: #{tpu_custom_call.1} parent=1 // loop_footer
      %s24 = sadd.s32 1, %s20
    $region7: #{tpu_custom_call.1} parent=1 // loop_footer_branch
      %19 = sbr.rel target = $region3
    $region8: #{tpu_custom_call.1} parent=1 // loop_exit
      _
    %1727 = vsyncpa [#allocation3], 1
    %s1728 = scalar_lea.sflag [#allocation3], 1
    %1729 = vsyncpa %s1728, 1

</llo_original>
